<compile_context>
chip_gen: v7x
topology: tpu7x:2x2x1
jax: 0.10.0
libtpu: 0.0.40
codegen_flags: <defaults>
</compile_context>

<pallas_src>
import numpy as np
import jax
import jax.numpy as jnp
from jax import lax
from jax.experimental import pallas as pl
from jax.experimental.pallas import tpu as pltpu

IGNORE_LABEL = 255


# ---------------------------------------------------------------------------
# Kernel A: fused bilinear upsample (align_corners=True) + softmax over C +
#           per-class errors, written directly in [C, B, H, W] layout.
# ---------------------------------------------------------------------------
def _fused_errors_kernel(x_ref, mh_ref, mwt_ref, lab_ref, nerr_ref, code_ref):
    mh = mh_ref[...]          # [TH, h]   row-interp rows for this tile
    mwt = mwt_ref[...]        # [w, W]    col-interp (already transposed)
    lab = lab_ref[...]        # [TH, W]   int32 labels
    C = nerr_ref.shape[0]

    # Width-first interpolation (lane-dense in W), then rows; per-class 2-D MXU matmuls.
    ups = []
    for c in range(C):
        t_c = jnp.dot(x_ref[c], mwt, preferred_element_type=jnp.float32)   # [h, W]
        ups.append(jnp.dot(mh, t_c, preferred_element_type=jnp.float32))   # [TH, W]

    # softmax over the class axis
    m = ups[0]
    for c in range(1, C):
        m = jnp.maximum(m, ups[c])
    s = jnp.zeros_like(m)
    for c in range(C):
        ups[c] = jnp.exp(ups[c] - m)
        s = s + ups[c]
    inv_s = 1.0 / s

    valid = (lab != IGNORE_LABEL).astype(jnp.float32)                      # [TH, W]
    for c in range(C):
        p_c = ups[c] * inv_s
        fg_c = (lab == c).astype(jnp.float32)                              # 255 never matches
        err_c = jnp.abs(fg_c - p_c) * valid                                # ignored -> 0
        nerr_ref[c] = -err_c                                               # negated sort key
        code_ref[c] = (2.0 * fg_c + valid).astype(jnp.bfloat16)            # 0=ign, 1=bg, 3=fg


def _pick_row_tile(H, W, C):
    """Largest TH that divides H, is a multiple of 8 (or == H), ~<= 2 MiB per f32 tile."""
    budget = max(8, (2 * 1024 * 1024) // max(1, 4 * C * W))
    for th in range(min(H, budget), 0, -1):
        if H % th == 0 and (th % 8 == 0 or th == H):
            return th
    return H


def fused_errors_pallas(preds, mh, mwt, target, th):
    B, C, h, w = preds.shape
    H, _ = mh.shape
    _, W = mwt.shape
    grid = (B, H // th)
    return pl.pallas_call(
        _fused_errors_kernel,
        out_shape=(
            jax.ShapeDtypeStruct((C, B, H, W), jnp.float32),   # -err
            jax.ShapeDtypeStruct((C, B, H, W), jnp.bfloat16),  # packed 2*fg + valid
        ),
        grid=grid,
        in_specs=[
            pl.BlockSpec((None, C, h, w), lambda b, t: (b, 0, 0, 0)),
            pl.BlockSpec((th, h), lambda b, t: (t, 0)),
            pl.BlockSpec((w, W), lambda b, t: (0, 0)),
            pl.BlockSpec((None, th, W), lambda b, t: (b, t, 0)),
        ],
        out_specs=(
            pl.BlockSpec((C, None, th, W), lambda b, t: (0, b, t, 0)),
            pl.BlockSpec((C, None, th, W), lambda b, t: (0, b, t, 0)),
        ),
        compiler_params=pltpu.CompilerParams(
            dimension_semantics=("parallel", "parallel"),
            vmem_limit_bytes=32 * 1024 * 1024,
        ),
    )(preds, mh, mwt, target)


# ---------------------------------------------------------------------------
# Kernel B: streamed Lovasz gradient + per-class dot + present-class mean.
#   Grid over N tiles (sequential); per-class running cumsums / loss partials
#   carried in VMEM scratch; in-tile cumsum via T x T triangular matmuls.
#   grad = jac(inclusive cumsums) - jac(exclusive cumsums)  (== first difference).
# ---------------------------------------------------------------------------
def _make_lovasz_kernel(T, K):
    def kernel(gts_ref, nerr_ref, code_ref, out_ref, csfg_ref, csbg_ref, lacc_ref):
        i = pl.program_id(0)

        @pl.when(i == 0)
        def _():
            csfg_ref[...] = jnp.zeros_like(csfg_ref)
            csbg_ref[...] = jnp.zeros_like(csbg_ref)
            lacc_ref[...] = jnp.zeros_like(lacc_ref)

        gts = gts_ref[...]                                     # [C, 1]
        jj = lax.broadcasted_iota(jnp.int32, (T, T), 0)
        ii = lax.broadcasted_iota(jnp.int32, (T, T), 1)
        U = (jj <= ii).astype(jnp.float32)                     # inclusive-cumsum matrix

        csfg = csfg_ref[...]
        csbg = csbg_ref[...]
        lacc = lacc_ref[...]

        for j in range(K):                                     # static, unrolled chunks
            lo = j * T
            code = code_ref[:, lo:lo + T].astype(jnp.float32)  # [C, T] values {0,1,3}
            err = -nerr_ref[:, lo:lo + T]                      # [C, T]
            fg = (code >= 2.0).astype(jnp.float32)
            bg = (code == 1.0).astype(jnp.float32)             # valid & not fg

            cs_fg = jnp.dot(fg, U, preferred_element_type=jnp.float32) + csfg
            cs_bg = jnp.dot(bg, U, preferred_element_type=jnp.float32) + csbg
            # inclusive jaccard; union >= gts >= 1 for present classes -> max() is exact
            jac = 1.0 - (gts - cs_fg) / jnp.maximum(gts + cs_bg, 1.0)
            # jaccard at previous position == jaccard at the exclusive cumsums
            prev = 1.0 - (gts - (cs_fg - fg)) / jnp.maximum(gts + (cs_bg - bg), 1.0)
            lacc = lacc + jnp.sum(err * (jac - prev), axis=1, keepdims=True)

            csfg = csfg + jnp.sum(fg, axis=1, keepdims=True)
            csbg = csbg + jnp.sum(bg, axis=1, keepdims=True)

        csfg_ref[...] = csfg
        csbg_ref[...] = csbg
        lacc_ref[...] = lacc

        @pl.when(i == pl.num_programs(0) - 1)
        def _():
            present = (gts > 0.0).astype(jnp.float32)          # [C, 1]
            num = jnp.sum(lacc * present)
            den = jnp.maximum(jnp.sum(present), 1.0)
            out_ref[0, 0] = num / den

    return kernel


def lovasz_flat_pallas(gts, nerr_s, code_s, T, TN):
    C, n_pad = nerr_s.shape
    K = TN // T
    grid = (n_pad // TN,)
    return pl.pallas_call(
        _make_lovasz_kernel(T, K),
        out_shape=jax.ShapeDtypeStruct((1, 1), jnp.float32),
        grid=grid,
        in_specs=[
            pl.BlockSpec((C, 1), lambda i: (0, 0)),
            pl.BlockSpec((C, TN), lambda i: (0, i)),
            pl.BlockSpec((C, TN), lambda i: (0, i)),
        ],
        out_specs=pl.BlockSpec(memory_space=pltpu.MemorySpace.SMEM),
        scratch_shapes=[
            pltpu.VMEM((C, 1), jnp.float32),   # running cumsum(fg)
            pltpu.VMEM((C, 1), jnp.float32),   # running cumsum(valid & !fg)
            pltpu.VMEM((C, 1), jnp.float32),   # per-class loss partials
        ],
        compiler_params=pltpu.CompilerParams(
            dimension_semantics=("arbitrary",),
            vmem_limit_bytes=32 * 1024 * 1024,
        ),
    )(gts, nerr_s, code_s)


# ---------------------------------------------------------------------------
# Glue
# ---------------------------------------------------------------------------
def _interp_matrix(out_size, in_size):
    """PyTorch bilinear align_corners=True interpolation matrix [out, in]."""
    M = np.zeros((out_size, in_size), np.float32)
    if out_size == 1 or in_size == 1:
        M[:, 0] = 1.0
        return M
    for i in range(out_size):
        src = i * (in_size - 1) / (out_size - 1)
        lo = int(np.floor(src))
        hi = min(lo + 1, in_size - 1)
        whi = src - lo
        M[i, lo] += 1.0 - whi
        M[i, hi] += whi
    return M


def _round_up(x, m):
    return ((x + m - 1) // m) * m


def lovasz_loss(preds, target, input_size):
    """LovaszLoss.forward (args.dsn=False path, per_image=False, ignore=255)."""
    # TODO(synk): pallas_call has no autodiff rule; training use needs a custom_vjp.
    B, C, h, w = preds.shape
    H, W = input_size

    mh = jnp.asarray(_interp_matrix(H, h))          # [H, h]
    mwt = jnp.asarray(_interp_matrix(W, w).T)       # [w, W]

    th = _pick_row_tile(H, W, C)
    nerr, code = fused_errors_pallas(preds.astype(jnp.float32), mh, mwt,
                                     target.astype(jnp.int32), th)

    N = B * H * W
    nerr = nerr.reshape(C, N)                       # free reshape: already [C, B*H*W] layout
    code = code.reshape(C, N)

    # Per-class foreground totals (permutation-invariant -> computed from labels directly).
    labf = target.reshape(1, N).astype(jnp.int32)
    gts = jnp.sum((labf == jnp.arange(C, dtype=jnp.int32)[:, None]).astype(jnp.float32),
                  axis=1, keepdims=True)            # [C, 1]

    # Pad N so the lovasz grid tiles evenly; padded entries (err=0, code=0) contribute 0.
    T = 256
    n_pad = _round_up(N, T)
    TN = min(4096, n_pad)
    n_pad = _round_up(n_pad, TN)
    if n_pad != N:
        nerr = jnp.pad(nerr, ((0, 0), (0, n_pad - N)))
        code = jnp.pad(code, ((0, 0), (0, n_pad - N)))

    # TODO(synk): per-class descending sort has no clean Pallas equivalent; it is one
    # multi-operand XLA sort (key = -err ascending, payload = packed fg/valid code).
    nerr_s, code_s = lax.sort((nerr, code), dimension=1, is_stable=False, num_keys=1)

    loss = lovasz_flat_pallas(gts, nerr_s, code_s, T=T, TN=TN)
    return loss[0, 0]


if __name__ == "__main__":
    key = jax.random.PRNGKey(0)
    B, C, h, w = 2, 4, 8, 8
    input_size = (16, 16)

    k1, k2, k3 = jax.random.split(key, 3)
    preds = jax.random.normal(k1, (B, C, h, w), jnp.float32)            # NCHW logits
    target = jax.random.randint(k2, (B,) + input_size, 0, C).astype(jnp.int32)
    ignore_mask = jax.random.bernoulli(k3, 0.05, (B,) + input_size)
    target = jnp.where(ignore_mask, IGNORE_LABEL, target)

    loss_fn = jax.jit(lambda p, t: lovasz_loss(p, t, input_size))
    loss = loss_fn(preds, target)
    jax.block_until_ready(loss)
    assert jnp.isfinite(loss)
    print("KERNEL_OK")
</pallas_src>

<mosaic_0001>
module attributes {stable_mosaic.version = 11 : i64} {
  func.func @_fused_errors_kernel(%arg0: i32, %arg1: i32, %arg2: memref<1x4x8x8xf32, #tpu.memory_space<vmem>>, %arg3: memref<16x8xf32, #tpu.memory_space<vmem>>, %arg4: memref<8x16xf32, #tpu.memory_space<vmem>>, %arg5: memref<1x16x16xi32, #tpu.memory_space<vmem>>, %arg6: memref<4x1x16x16xf32, #tpu.memory_space<vmem>>, %arg7: memref<4x1x16x16xbf16, #tpu.memory_space<vmem>>) attributes {dimension_semantics = [#tpu.dimension_semantics<parallel>, #tpu.dimension_semantics<parallel>], iteration_bounds = array<i64: 2, 1>, scalar_prefetch = 0 : i64, scratch_operands = 0 : i64, tpu.core_type = #tpu.core_type<tc>, window_params = [{transform_indices = @transform_0, window_bounds = array<i64: 1, 4, 8, 8>}, {transform_indices = @transform_1, window_bounds = array<i64: 16, 8>}, {pipeline_mode = #tpu.pipeline_mode<synchronous>, transform_indices = @transform_2, window_bounds = array<i64: 8, 16>}, {transform_indices = @transform_3, window_bounds = array<i64: 1, 16, 16>}, {transform_indices = @transform_4, window_bounds = array<i64: 4, 1, 16, 16>}, {transform_indices = @transform_5, window_bounds = array<i64: 4, 1, 16, 16>}]} {
    %c0 = arith.constant 0 : index
    %c0_0 = arith.constant 0 : index
    %0 = vector.load %arg3[%c0, %c0_0] : memref<16x8xf32, #tpu.memory_space<vmem>>, vector<16x8xf32>
    %c0_1 = arith.constant 0 : index
    %c0_2 = arith.constant 0 : index
    %1 = vector.load %arg4[%c0_1, %c0_2] : memref<8x16xf32, #tpu.memory_space<vmem>>, vector<8x16xf32>
    %c0_3 = arith.constant 0 : index
    %c0_4 = arith.constant 0 : index
    %c0_5 = arith.constant 0 : index
    %2 = vector.load %arg5[%c0_3, %c0_4, %c0_5] : memref<1x16x16xi32, #tpu.memory_space<vmem>>, vector<1x16x16xi32>
    %3 = vector.shape_cast %2 : vector<1x16x16xi32> to vector<16x16xi32>
    %c0_6 = arith.constant 0 : index
    %c0_7 = arith.constant 0 : index
    %c0_8 = arith.constant 0 : index
    %c0_9 = arith.constant 0 : index
    %4 = vector.load %arg2[%c0_6, %c0_7, %c0_8, %c0_9] : memref<1x4x8x8xf32, #tpu.memory_space<vmem>>, vector<1x1x8x8xf32>
    %5 = vector.shape_cast %4 : vector<1x1x8x8xf32> to vector<8x8xf32>
    %cst = arith.constant dense<0.000000e+00> : vector<8x16xf32>
    %6 = tpu.matmul %5, %1, %cst {dimension_numbers = #tpu.dot_dimension_numbers<[1], [0], [0], [1], [0, 0, 1, 1], [], []>} : vector<8x8xf32>, vector<8x16xf32>, vector<8x16xf32> -> vector<8x16xf32>
    %cst_10 = arith.constant dense<0.000000e+00> : vector<16x16xf32>
    %7 = tpu.matmul %0, %6, %cst_10 {dimension_numbers = #tpu.dot_dimension_numbers<[1], [0], [0], [1], [0, 0, 1, 1], [], []>} : vector<16x8xf32>, vector<8x16xf32>, vector<16x16xf32> -> vector<16x16xf32>
    %c0_11 = arith.constant 0 : index
    %c1 = arith.constant 1 : index
    %c0_12 = arith.constant 0 : index
    %c0_13 = arith.constant 0 : index
    %8 = vector.load %arg2[%c0_11, %c1, %c0_12, %c0_13] : memref<1x4x8x8xf32, #tpu.memory_space<vmem>>, vector<1x1x8x8xf32>
    %9 = vector.shape_cast %8 : vector<1x1x8x8xf32> to vector<8x8xf32>
    %cst_14 = arith.constant dense<0.000000e+00> : vector<8x16xf32>
    %10 = tpu.matmul %9, %1, %cst_14 {dimension_numbers = #tpu.dot_dimension_numbers<[1], [0], [0], [1], [0, 0, 1, 1], [], []>} : vector<8x8xf32>, vector<8x16xf32>, vector<8x16xf32> -> vector<8x16xf32>
    %cst_15 = arith.constant dense<0.000000e+00> : vector<16x16xf32>
    %11 = tpu.matmul %0, %10, %cst_15 {dimension_numbers = #tpu.dot_dimension_numbers<[1], [0], [0], [1], [0, 0, 1, 1], [], []>} : vector<16x8xf32>, vector<8x16xf32>, vector<16x16xf32> -> vector<16x16xf32>
    %c0_16 = arith.constant 0 : index
    %c2 = arith.constant 2 : index
    %c0_17 = arith.constant 0 : index
    %c0_18 = arith.constant 0 : index
    %12 = vector.load %arg2[%c0_16, %c2, %c0_17, %c0_18] : memref<1x4x8x8xf32, #tpu.memory_space<vmem>>, vector<1x1x8x8xf32>
    %13 = vector.shape_cast %12 : vector<1x1x8x8xf32> to vector<8x8xf32>
    %cst_19 = arith.constant dense<0.000000e+00> : vector<8x16xf32>
    %14 = tpu.matmul %13, %1, %cst_19 {dimension_numbers = #tpu.dot_dimension_numbers<[1], [0], [0], [1], [0, 0, 1, 1], [], []>} : vector<8x8xf32>, vector<8x16xf32>, vector<8x16xf32> -> vector<8x16xf32>
    %cst_20 = arith.constant dense<0.000000e+00> : vector<16x16xf32>
    %15 = tpu.matmul %0, %14, %cst_20 {dimension_numbers = #tpu.dot_dimension_numbers<[1], [0], [0], [1], [0, 0, 1, 1], [], []>} : vector<16x8xf32>, vector<8x16xf32>, vector<16x16xf32> -> vector<16x16xf32>
    %c0_21 = arith.constant 0 : index
    %c3 = arith.constant 3 : index
    %c0_22 = arith.constant 0 : index
    %c0_23 = arith.constant 0 : index
    %16 = vector.load %arg2[%c0_21, %c3, %c0_22, %c0_23] : memref<1x4x8x8xf32, #tpu.memory_space<vmem>>, vector<1x1x8x8xf32>
    %17 = vector.shape_cast %16 : vector<1x1x8x8xf32> to vector<8x8xf32>
    %cst_24 = arith.constant dense<0.000000e+00> : vector<8x16xf32>
    %18 = tpu.matmul %17, %1, %cst_24 {dimension_numbers = #tpu.dot_dimension_numbers<[1], [0], [0], [1], [0, 0, 1, 1], [], []>} : vector<8x8xf32>, vector<8x16xf32>, vector<8x16xf32> -> vector<8x16xf32>
    %cst_25 = arith.constant dense<0.000000e+00> : vector<16x16xf32>
    %19 = tpu.matmul %0, %18, %cst_25 {dimension_numbers = #tpu.dot_dimension_numbers<[1], [0], [0], [1], [0, 0, 1, 1], [], []>} : vector<16x8xf32>, vector<8x16xf32>, vector<16x16xf32> -> vector<16x16xf32>
    %20 = arith.maximumf %7, %11 : vector<16x16xf32>
    %21 = arith.maximumf %20, %15 : vector<16x16xf32>
    %22 = arith.maximumf %21, %19 : vector<16x16xf32>
    %cst_26 = arith.constant 0.000000e+00 : f32
    %23 = vector.broadcast %cst_26 : f32 to vector<16x16xf32>
    %24 = arith.subf %7, %22 : vector<16x16xf32>
    %25 = math.exp %24 : vector<16x16xf32>
    %26 = arith.addf %23, %25 : vector<16x16xf32>
    %27 = arith.subf %11, %22 : vector<16x16xf32>
    %28 = math.exp %27 : vector<16x16xf32>
    %29 = arith.addf %26, %28 : vector<16x16xf32>
    %30 = arith.subf %15, %22 : vector<16x16xf32>
    %31 = math.exp %30 : vector<16x16xf32>
    %32 = arith.addf %29, %31 : vector<16x16xf32>
    %33 = arith.subf %19, %22 : vector<16x16xf32>
    %34 = math.exp %33 : vector<16x16xf32>
    %35 = arith.addf %32, %34 : vector<16x16xf32>
    %cst_27 = arith.constant 1.000000e+00 : f32
    %36 = vector.broadcast %cst_27 : f32 to vector<16x16xf32>
    %37 = arith.divf %36, %35 : vector<16x16xf32>
    %c255_i32 = arith.constant 255 : i32
    %38 = vector.broadcast %c255_i32 : i32 to vector<16x16xi32>
    %39 = arith.cmpi ne, %3, %38 : vector<16x16xi32>
    %40 = arith.extui %39 : vector<16x16xi1> to vector<16x16xi32>
    %41 = arith.sitofp %40 : vector<16x16xi32> to vector<16x16xf32>
    %42 = arith.mulf %25, %37 : vector<16x16xf32>
    %c0_i32 = arith.constant 0 : i32
    %43 = vector.broadcast %c0_i32 : i32 to vector<16x16xi32>
    %44 = arith.cmpi eq, %3, %43 : vector<16x16xi32>
    %45 = arith.extui %44 : vector<16x16xi1> to vector<16x16xi32>
    %46 = arith.sitofp %45 : vector<16x16xi32> to vector<16x16xf32>
    %47 = arith.subf %46, %42 : vector<16x16xf32>
    %48 = math.absf %47 : vector<16x16xf32>
    %49 = arith.mulf %48, %41 : vector<16x16xf32>
    %cst_28 = arith.constant 0.000000e+00 : f32
    %50 = vector.broadcast %cst_28 : f32 to vector<16x16xf32>
    %51 = arith.subf %50, %49 : vector<16x16xf32>
    %c0_29 = arith.constant 0 : index
    %c0_30 = arith.constant 0 : index
    %c0_31 = arith.constant 0 : index
    %c0_32 = arith.constant 0 : index
    %52 = vector.load %arg6[%c0_29, %c0_30, %c0_31, %c0_32] : memref<4x1x16x16xf32, #tpu.memory_space<vmem>>, vector<1x1x16x16xf32>
    %53 = vector.shape_cast %52 : vector<1x1x16x16xf32> to vector<16x16xf32>
    %54 = vector.shape_cast %51 : vector<16x16xf32> to vector<1x1x16x16xf32>
    tpu.vector_store %arg6[%c0_29, %c0_30, %c0_31, %c0_32], %54 {strides = array<i32>} : memref<4x1x16x16xf32, #tpu.memory_space<vmem>>, vector<1x1x16x16xf32>,
    %cst_33 = arith.constant 2.000000e+00 : f32
    %55 = vector.broadcast %cst_33 : f32 to vector<16x16xf32>
    %56 = arith.mulf %55, %46 : vector<16x16xf32>
    %57 = arith.addf %56, %41 : vector<16x16xf32>
    %58 = arith.truncf %57 : vector<16x16xf32> to vector<16x16xbf16>
    %c0_34 = arith.constant 0 : index
    %c0_35 = arith.constant 0 : index
    %c0_36 = arith.constant 0 : index
    %c0_37 = arith.constant 0 : index
    %59 = vector.load %arg7[%c0_34, %c0_35, %c0_36, %c0_37] : memref<4x1x16x16xbf16, #tpu.memory_space<vmem>>, vector<1x1x16x16xbf16>
    %60 = vector.shape_cast %59 : vector<1x1x16x16xbf16> to vector<16x16xbf16>
    %61 = vector.shape_cast %58 : vector<16x16xbf16> to vector<1x1x16x16xbf16>
    tpu.vector_store %arg7[%c0_34, %c0_35, %c0_36, %c0_37], %61 {strides = array<i32>} : memref<4x1x16x16xbf16, #tpu.memory_space<vmem>>, vector<1x1x16x16xbf16>,
    %62 = arith.mulf %28, %37 : vector<16x16xf32>
    %c1_i32 = arith.constant 1 : i32
    %63 = vector.broadcast %c1_i32 : i32 to vector<16x16xi32>
    %64 = arith.cmpi eq, %3, %63 : vector<16x16xi32>
    %65 = arith.extui %64 : vector<16x16xi1> to vector<16x16xi32>
    %66 = arith.sitofp %65 : vector<16x16xi32> to vector<16x16xf32>
    %67 = arith.subf %66, %62 : vector<16x16xf32>
    %68 = math.absf %67 : vector<16x16xf32>
    %69 = arith.mulf %68, %41 : vector<16x16xf32>
    %cst_38 = arith.constant 0.000000e+00 : f32
    %70 = vector.broadcast %cst_38 : f32 to vector<16x16xf32>
    %71 = arith.subf %70, %69 : vector<16x16xf32>
    %c1_39 = arith.constant 1 : index
    %c0_40 = arith.constant 0 : index
    %c0_41 = arith.constant 0 : index
    %c0_42 = arith.constant 0 : index
    %72 = vector.load %arg6[%c1_39, %c0_40, %c0_41, %c0_42] : memref<4x1x16x16xf32, #tpu.memory_space<vmem>>, vector<1x1x16x16xf32>
    %73 = vector.shape_cast %72 : vector<1x1x16x16xf32> to vector<16x16xf32>
    %74 = vector.shape_cast %71 : vector<16x16xf32> to vector<1x1x16x16xf32>
    tpu.vector_store %arg6[%c1_39, %c0_40, %c0_41, %c0_42], %74 {strides = array<i32>} : memref<4x1x16x16xf32, #tpu.memory_space<vmem>>, vector<1x1x16x16xf32>,
    %cst_43 = arith.constant 2.000000e+00 : f32
    %75 = vector.broadcast %cst_43 : f32 to vector<16x16xf32>
    %76 = arith.mulf %75, %66 : vector<16x16xf32>
    %77 = arith.addf %76, %41 : vector<16x16xf32>
    %78 = arith.truncf %77 : vector<16x16xf32> to vector<16x16xbf16>
    %c1_44 = arith.constant 1 : index
    %c0_45 = arith.constant 0 : index
    %c0_46 = arith.constant 0 : index
    %c0_47 = arith.constant 0 : index
    %79 = vector.load %arg7[%c1_44, %c0_45, %c0_46, %c0_47] : memref<4x1x16x16xbf16, #tpu.memory_space<vmem>>, vector<1x1x16x16xbf16>
    %80 = vector.shape_cast %79 : vector<1x1x16x16xbf16> to vector<16x16xbf16>
    %81 = vector.shape_cast %78 : vector<16x16xbf16> to vector<1x1x16x16xbf16>
    tpu.vector_store %arg7[%c1_44, %c0_45, %c0_46, %c0_47], %81 {strides = array<i32>} : memref<4x1x16x16xbf16, #tpu.memory_space<vmem>>, vector<1x1x16x16xbf16>,
    %82 = arith.mulf %31, %37 : vector<16x16xf32>
    %c2_i32 = arith.constant 2 : i32
    %83 = vector.broadcast %c2_i32 : i32 to vector<16x16xi32>
    %84 = arith.cmpi eq, %3, %83 : vector<16x16xi32>
    %85 = arith.extui %84 : vector<16x16xi1> to vector<16x16xi32>
    %86 = arith.sitofp %85 : vector<16x16xi32> to vector<16x16xf32>
    %87 = arith.subf %86, %82 : vector<16x16xf32>
    %88 = math.absf %87 : vector<16x16xf32>
    %89 = arith.mulf %88, %41 : vector<16x16xf32>
    %cst_48 = arith.constant 0.000000e+00 : f32
    %90 = vector.broadcast %cst_48 : f32 to vector<16x16xf32>
    %91 = arith.subf %90, %89 : vector<16x16xf32>
    %c2_49 = arith.constant 2 : index
    %c0_50 = arith.constant 0 : index
    %c0_51 = arith.constant 0 : index
    %c0_52 = arith.constant 0 : index
    %92 = vector.load %arg6[%c2_49, %c0_50, %c0_51, %c0_52] : memref<4x1x16x16xf32, #tpu.memory_space<vmem>>, vector<1x1x16x16xf32>
    %93 = vector.shape_cast %92 : vector<1x1x16x16xf32> to vector<16x16xf32>
    %94 = vector.shape_cast %91 : vector<16x16xf32> to vector<1x1x16x16xf32>
    tpu.vector_store %arg6[%c2_49, %c0_50, %c0_51, %c0_52], %94 {strides = array<i32>} : memref<4x1x16x16xf32, #tpu.memory_space<vmem>>, vector<1x1x16x16xf32>,
    %cst_53 = arith.constant 2.000000e+00 : f32
    %95 = vector.broadcast %cst_53 : f32 to vector<16x16xf32>
    %96 = arith.mulf %95, %86 : vector<16x16xf32>
    %97 = arith.addf %96, %41 : vector<16x16xf32>
    %98 = arith.truncf %97 : vector<16x16xf32> to vector<16x16xbf16>
    %c2_54 = arith.constant 2 : index
    %c0_55 = arith.constant 0 : index
    %c0_56 = arith.constant 0 : index
    %c0_57 = arith.constant 0 : index
    %99 = vector.load %arg7[%c2_54, %c0_55, %c0_56, %c0_57] : memref<4x1x16x16xbf16, #tpu.memory_space<vmem>>, vector<1x1x16x16xbf16>
    %100 = vector.shape_cast %99 : vector<1x1x16x16xbf16> to vector<16x16xbf16>
    %101 = vector.shape_cast %98 : vector<16x16xbf16> to vector<1x1x16x16xbf16>
    tpu.vector_store %arg7[%c2_54, %c0_55, %c0_56, %c0_57], %101 {strides = array<i32>} : memref<4x1x16x16xbf16, #tpu.memory_space<vmem>>, vector<1x1x16x16xbf16>,
    %102 = arith.mulf %34, %37 : vector<16x16xf32>
    %c3_i32 = arith.constant 3 : i32
    %103 = vector.broadcast %c3_i32 : i32 to vector<16x16xi32>
    %104 = arith.cmpi eq, %3, %103 : vector<16x16xi32>
    %105 = arith.extui %104 : vector<16x16xi1> to vector<16x16xi32>
    %106 = arith.sitofp %105 : vector<16x16xi32> to vector<16x16xf32>
    %107 = arith.subf %106, %102 : vector<16x16xf32>
    %108 = math.absf %107 : vector<16x16xf32>
    %109 = arith.mulf %108, %41 : vector<16x16xf32>
    %cst_58 = arith.constant 0.000000e+00 : f32
    %110 = vector.broadcast %cst_58 : f32 to vector<16x16xf32>
    %111 = arith.subf %110, %109 : vector<16x16xf32>
    %c3_59 = arith.constant 3 : index
    %c0_60 = arith.constant 0 : index
    %c0_61 = arith.constant 0 : index
    %c0_62 = arith.constant 0 : index
    %112 = vector.load %arg6[%c3_59, %c0_60, %c0_61, %c0_62] : memref<4x1x16x16xf32, #tpu.memory_space<vmem>>, vector<1x1x16x16xf32>
    %113 = vector.shape_cast %112 : vector<1x1x16x16xf32> to vector<16x16xf32>
    %114 = vector.shape_cast %111 : vector<16x16xf32> to vector<1x1x16x16xf32>
    tpu.vector_store %arg6[%c3_59, %c0_60, %c0_61, %c0_62], %114 {strides = array<i32>} : memref<4x1x16x16xf32, #tpu.memory_space<vmem>>, vector<1x1x16x16xf32>,
    %cst_63 = arith.constant 2.000000e+00 : f32
    %115 = vector.broadcast %cst_63 : f32 to vector<16x16xf32>
    %116 = arith.mulf %115, %106 : vector<16x16xf32>
    %117 = arith.addf %116, %41 : vector<16x16xf32>
    %118 = arith.truncf %117 : vector<16x16xf32> to vector<16x16xbf16>
    %c3_64 = arith.constant 3 : index
    %c0_65 = arith.constant 0 : index
    %c0_66 = arith.constant 0 : index
    %c0_67 = arith.constant 0 : index
    %119 = vector.load %arg7[%c3_64, %c0_65, %c0_66, %c0_67] : memref<4x1x16x16xbf16, #tpu.memory_space<vmem>>, vector<1x1x16x16xbf16>
    %120 = vector.shape_cast %119 : vector<1x1x16x16xbf16> to vector<16x16xbf16>
    %121 = vector.shape_cast %118 : vector<16x16xbf16> to vector<1x1x16x16xbf16>
    tpu.vector_store %arg7[%c3_64, %c0_65, %c0_66, %c0_67], %121 {strides = array<i32>} : memref<4x1x16x16xbf16, #tpu.memory_space<vmem>>, vector<1x1x16x16xbf16>,
    return
  }
  func.func @transform_0(%arg0: i32, %arg1: i32) -> (i32, i32, i32, i32) {
    %c0_i32 = arith.constant 0 : i32
    %c0_i32_0 = arith.constant 0 : i32
    %c0_i32_1 = arith.constant 0 : i32
    %c0_i32_2 = arith.constant 0 : i32
    return %arg0, %c0_i32, %c0_i32_0, %c0_i32_1 : i32, i32, i32, i32
  }
  func.func @transform_1(%arg0: i32, %arg1: i32) -> (i32, i32) {
    %c0_i32 = arith.constant 0 : i32
    %c0_i32_0 = arith.constant 0 : i32
    return %arg1, %c0_i32 : i32, i32
  }
  func.func @transform_2(%arg0: i32, %arg1: i32) -> (i32, i32) {
    %c0_i32 = arith.constant 0 : i32
    %c0_i32_0 = arith.constant 0 : i32
    %c0_i32_1 = arith.constant 0 : i32
    return %c0_i32, %c0_i32_0 : i32, i32
  }
  func.func @transform_3(%arg0: i32, %arg1: i32) -> (i32, i32, i32) {
    %c0_i32 = arith.constant 0 : i32
    %c0_i32_0 = arith.constant 0 : i32
    return %arg0, %arg1, %c0_i32 : i32, i32, i32
  }
  func.func @transform_4(%arg0: i32, %arg1: i32) -> (i32, i32, i32, i32) {
    %c0_i32 = arith.constant 0 : i32
    %c0_i32_0 = arith.constant 0 : i32
    %c0_i32_1 = arith.constant 0 : i32
    return %c0_i32, %arg0, %arg1, %c0_i32_0 : i32, i32, i32, i32
  }
  func.func @transform_5(%arg0: i32, %arg1: i32) -> (i32, i32, i32, i32) {
    %c0_i32 = arith.constant 0 : i32
    %c0_i32_0 = arith.constant 0 : i32
    %c0_i32_1 = arith.constant 0 : i32
    return %c0_i32, %arg0, %arg1, %c0_i32_0 : i32, i32, i32, i32
  }
}

module attributes {stable_mosaic.version = 11 : i64} {
  func.func @kernel(%arg0: i32, %arg1: memref<4x1xf32, #tpu.memory_space<vmem>>, %arg2: memref<4x512xf32, #tpu.memory_space<vmem>>, %arg3: memref<4x512xbf16, #tpu.memory_space<vmem>>, %arg4: memref<1x1xf32, #tpu.memory_space<smem>>, %arg5: memref<4x1xf32, #tpu.memory_space<vmem>>, %arg6: memref<4x1xf32, #tpu.memory_space<vmem>>, %arg7: memref<4x1xf32, #tpu.memory_space<vmem>>) attributes {dimension_semantics = [#tpu.dimension_semantics<arbitrary>], iteration_bounds = array<i64: 1>, scalar_prefetch = 0 : i64, scratch_operands = 3 : i64, tpu.core_type = #tpu.core_type<tc>, window_params = [{pipeline_mode = #tpu.pipeline_mode<synchronous>, transform_indices = @transform_0, window_bounds = array<i64: 4, 1>}, {transform_indices = @transform_1, window_bounds = array<i64: 4, 512>}, {transform_indices = @transform_2, window_bounds = array<i64: 4, 512>}, {transform_indices = @transform_3, window_bounds = array<i64: 1, 1>}]} {
    %c0_i32 = arith.constant 0 : i32
    %0 = arith.cmpi eq, %arg0, %c0_i32 : i32
    %1 = arith.extui %0 : i1 to i32
    %c0_i32_0 = arith.constant 0 : i32
    %2 = arith.cmpi ne, %1, %c0_i32_0 : i32
    scf.if %2 {
      %cst_46 = arith.constant 0.000000e+00 : f32
      %118 = vector.broadcast %cst_46 : f32 to vector<4x1xf32>
      %c0_47 = arith.constant 0 : index
      %c0_48 = arith.constant 0 : index
      %119 = vector.load %arg5[%c0_47, %c0_48] : memref<4x1xf32, #tpu.memory_space<vmem>>, vector<4x1xf32>
      tpu.vector_store %arg5[%c0_47, %c0_48], %118 {strides = array<i32>} : memref<4x1xf32, #tpu.memory_space<vmem>>, vector<4x1xf32>,
      %cst_49 = arith.constant 0.000000e+00 : f32
      %120 = vector.broadcast %cst_49 : f32 to vector<4x1xf32>
      %c0_50 = arith.constant 0 : index
      %c0_51 = arith.constant 0 : index
      %121 = vector.load %arg6[%c0_50, %c0_51] : memref<4x1xf32, #tpu.memory_space<vmem>>, vector<4x1xf32>
      tpu.vector_store %arg6[%c0_50, %c0_51], %120 {strides = array<i32>} : memref<4x1xf32, #tpu.memory_space<vmem>>, vector<4x1xf32>,
      %cst_52 = arith.constant 0.000000e+00 : f32
      %122 = vector.broadcast %cst_52 : f32 to vector<4x1xf32>
      %c0_53 = arith.constant 0 : index
      %c0_54 = arith.constant 0 : index
      %123 = vector.load %arg7[%c0_53, %c0_54] : memref<4x1xf32, #tpu.memory_space<vmem>>, vector<4x1xf32>
      tpu.vector_store %arg7[%c0_53, %c0_54], %122 {strides = array<i32>} : memref<4x1xf32, #tpu.memory_space<vmem>>, vector<4x1xf32>,
    } else {
    }
    %c0 = arith.constant 0 : index
    %c0_1 = arith.constant 0 : index
    %3 = vector.load %arg1[%c0, %c0_1] : memref<4x1xf32, #tpu.memory_space<vmem>>, vector<4x1xf32>
    %4 = tpu.iota {dimensions = array<i32: 0>} : vector<256x256xi32>
    %5 = tpu.iota {dimensions = array<i32: 1>} : vector<256x256xi32>
    %6 = arith.cmpi sle, %4, %5 : vector<256x256xi32>
    %7 = arith.extui %6 : vector<256x256xi1> to vector<256x256xi32>
    %8 = arith.sitofp %7 : vector<256x256xi32> to vector<256x256xf32>
    %c0_2 = arith.constant 0 : index
    %c0_3 = arith.constant 0 : index
    %9 = vector.load %arg5[%c0_2, %c0_3] : memref<4x1xf32, #tpu.memory_space<vmem>>, vector<4x1xf32>
    %c0_4 = arith.constant 0 : index
    %c0_5 = arith.constant 0 : index
    %10 = vector.load %arg6[%c0_4, %c0_5] : memref<4x1xf32, #tpu.memory_space<vmem>>, vector<4x1xf32>
    %c0_6 = arith.constant 0 : index
    %c0_7 = arith.constant 0 : index
    %11 = vector.load %arg7[%c0_6, %c0_7] : memref<4x1xf32, #tpu.memory_space<vmem>>, vector<4x1xf32>
    %c0_8 = arith.constant 0 : index
    %c0_9 = arith.constant 0 : index
    %12 = vector.load %arg3[%c0_8, %c0_9] : memref<4x512xbf16, #tpu.memory_space<vmem>>, vector<4x256xbf16>
    %13 = arith.extf %12 : vector<4x256xbf16> to vector<4x256xf32>
    %c0_10 = arith.constant 0 : index
    %c0_11 = arith.constant 0 : index
    %14 = vector.load %arg2[%c0_10, %c0_11] : memref<4x512xf32, #tpu.memory_space<vmem>>, vector<4x256xf32>
    %cst = arith.constant 0.000000e+00 : f32
    %15 = vector.broadcast %cst : f32 to vector<4x256xf32>
    %16 = arith.subf %15, %14 : vector<4x256xf32>
    %cst_12 = arith.constant 2.000000e+00 : f32
    %17 = vector.broadcast %cst_12 : f32 to vector<4x256xf32>
    %18 = arith.cmpf oge, %13, %17 : vector<4x256xf32>
    %19 = arith.extui %18 : vector<4x256xi1> to vector<4x256xi32>
    %20 = arith.sitofp %19 : vector<4x256xi32> to vector<4x256xf32>
    %cst_13 = arith.constant 1.000000e+00 : f32
    %21 = vector.broadcast %cst_13 : f32 to vector<4x256xf32>
    %22 = arith.cmpf oeq, %13, %21 : vector<4x256xf32>
    %23 = arith.extui %22 : vector<4x256xi1> to vector<4x256xi32>
    %24 = arith.sitofp %23 : vector<4x256xi32> to vector<4x256xf32>
    %cst_14 = arith.constant dense<0.000000e+00> : vector<4x256xf32>
    %25 = tpu.matmul %20, %8, %cst_14 {dimension_numbers = #tpu.dot_dimension_numbers<[1], [0], [0], [1], [0, 0, 1, 1], [], []>} : vector<4x256xf32>, vector<256x256xf32>, vector<4x256xf32> -> vector<4x256xf32>
    %26 = vector.broadcast %9 : vector<4x1xf32> to vector<4x256xf32>
    %27 = arith.addf %25, %26 : vector<4x256xf32>
    %cst_15 = arith.constant dense<0.000000e+00> : vector<4x256xf32>
    %28 = tpu.matmul %24, %8, %cst_15 {dimension_numbers = #tpu.dot_dimension_numbers<[1], [0], [0], [1], [0, 0, 1, 1], [], []>} : vector<4x256xf32>, vector<256x256xf32>, vector<4x256xf32> -> vector<4x256xf32>
    %29 = vector.broadcast %10 : vector<4x1xf32> to vector<4x256xf32>
    %30 = arith.addf %28, %29 : vector<4x256xf32>
    %31 = vector.broadcast %3 : vector<4x1xf32> to vector<4x256xf32>
    %32 = arith.subf %31, %27 : vector<4x256xf32>
    %33 = vector.broadcast %3 : vector<4x1xf32> to vector<4x256xf32>
    %34 = arith.addf %33, %30 : vector<4x256xf32>
    %cst_16 = arith.constant 1.000000e+00 : f32
    %35 = vector.broadcast %cst_16 : f32 to vector<4x256xf32>
    %36 = arith.maximumf %34, %35 : vector<4x256xf32>
    %37 = arith.divf %32, %36 : vector<4x256xf32>
    %cst_17 = arith.constant 1.000000e+00 : f32
    %38 = vector.broadcast %cst_17 : f32 to vector<4x256xf32>
    %39 = arith.subf %38, %37 : vector<4x256xf32>
    %40 = arith.subf %27, %20 : vector<4x256xf32>
    %41 = vector.broadcast %3 : vector<4x1xf32> to vector<4x256xf32>
    %42 = arith.subf %41, %40 : vector<4x256xf32>
    %43 = arith.subf %30, %24 : vector<4x256xf32>
    %44 = vector.broadcast %3 : vector<4x1xf32> to vector<4x256xf32>
    %45 = arith.addf %44, %43 : vector<4x256xf32>
    %cst_18 = arith.constant 1.000000e+00 : f32
    %46 = vector.broadcast %cst_18 : f32 to vector<4x256xf32>
    %47 = arith.maximumf %45, %46 : vector<4x256xf32>
    %48 = arith.divf %42, %47 : vector<4x256xf32>
    %cst_19 = arith.constant 1.000000e+00 : f32
    %49 = vector.broadcast %cst_19 : f32 to vector<4x256xf32>
    %50 = arith.subf %49, %48 : vector<4x256xf32>
    %51 = arith.subf %39, %50 : vector<4x256xf32>
    %52 = arith.mulf %16, %51 : vector<4x256xf32>
    %cst_20 = arith.constant dense<0.000000e+00> : vector<4xf32>
    %53 = vector.multi_reduction <add>, %52, %cst_20 [1] : vector<4x256xf32> to vector<4xf32>
    %54 = vector.shape_cast %53 : vector<4xf32> to vector<4x1xf32>
    %55 = arith.addf %11, %54 : vector<4x1xf32>
    %cst_21 = arith.constant dense<0.000000e+00> : vector<4xf32>
    %56 = vector.multi_reduction <add>, %20, %cst_21 [1] : vector<4x256xf32> to vector<4xf32>
    %57 = vector.shape_cast %56 : vector<4xf32> to vector<4x1xf32>
    %58 = arith.addf %9, %57 : vector<4x1xf32>
    %cst_22 = arith.constant dense<0.000000e+00> : vector<4xf32>
    %59 = vector.multi_reduction <add>, %24, %cst_22 [1] : vector<4x256xf32> to vector<4xf32>
    %60 = vector.shape_cast %59 : vector<4xf32> to vector<4x1xf32>
    %61 = arith.addf %10, %60 : vector<4x1xf32>
    %c0_23 = arith.constant 0 : index
    %c256 = arith.constant 256 : index
    %62 = vector.load %arg3[%c0_23, %c256] : memref<4x512xbf16, #tpu.memory_space<vmem>>, vector<4x256xbf16>
    %63 = arith.extf %62 : vector<4x256xbf16> to vector<4x256xf32>
    %c0_24 = arith.constant 0 : index
    %c256_25 = arith.constant 256 : index
    %64 = vector.load %arg2[%c0_24, %c256_25] : memref<4x512xf32, #tpu.memory_space<vmem>>, vector<4x256xf32>
    %cst_26 = arith.constant 0.000000e+00 : f32
    %65 = vector.broadcast %cst_26 : f32 to vector<4x256xf32>
    %66 = arith.subf %65, %64 : vector<4x256xf32>
    %cst_27 = arith.constant 2.000000e+00 : f32
    %67 = vector.broadcast %cst_27 : f32 to vector<4x256xf32>
    %68 = arith.cmpf oge, %63, %67 : vector<4x256xf32>
    %69 = arith.extui %68 : vector<4x256xi1> to vector<4x256xi32>
    %70 = arith.sitofp %69 : vector<4x256xi32> to vector<4x256xf32>
    %cst_28 = arith.constant 1.000000e+00 : f32
    %71 = vector.broadcast %cst_28 : f32 to vector<4x256xf32>
    %72 = arith.cmpf oeq, %63, %71 : vector<4x256xf32>
    %73 = arith.extui %72 : vector<4x256xi1> to vector<4x256xi32>
    %74 = arith.sitofp %73 : vector<4x256xi32> to vector<4x256xf32>
    %cst_29 = arith.constant dense<0.000000e+00> : vector<4x256xf32>
    %75 = tpu.matmul %70, %8, %cst_29 {dimension_numbers = #tpu.dot_dimension_numbers<[1], [0], [0], [1], [0, 0, 1, 1], [], []>} : vector<4x256xf32>, vector<256x256xf32>, vector<4x256xf32> -> vector<4x256xf32>
    %76 = vector.broadcast %58 : vector<4x1xf32> to vector<4x256xf32>
    %77 = arith.addf %75, %76 : vector<4x256xf32>
    %cst_30 = arith.constant dense<0.000000e+00> : vector<4x256xf32>
    %78 = tpu.matmul %74, %8, %cst_30 {dimension_numbers = #tpu.dot_dimension_numbers<[1], [0], [0], [1], [0, 0, 1, 1], [], []>} : vector<4x256xf32>, vector<256x256xf32>, vector<4x256xf32> -> vector<4x256xf32>
    %79 = vector.broadcast %61 : vector<4x1xf32> to vector<4x256xf32>
    %80 = arith.addf %78, %79 : vector<4x256xf32>
    %81 = vector.broadcast %3 : vector<4x1xf32> to vector<4x256xf32>
    %82 = arith.subf %81, %77 : vector<4x256xf32>
    %83 = vector.broadcast %3 : vector<4x1xf32> to vector<4x256xf32>
    %84 = arith.addf %83, %80 : vector<4x256xf32>
    %cst_31 = arith.constant 1.000000e+00 : f32
    %85 = vector.broadcast %cst_31 : f32 to vector<4x256xf32>
    %86 = arith.maximumf %84, %85 : vector<4x256xf32>
    %87 = arith.divf %82, %86 : vector<4x256xf32>
    %cst_32 = arith.constant 1.000000e+00 : f32
    %88 = vector.broadcast %cst_32 : f32 to vector<4x256xf32>
    %89 = arith.subf %88, %87 : vector<4x256xf32>
    %90 = arith.subf %77, %70 : vector<4x256xf32>
    %91 = vector.broadcast %3 : vector<4x1xf32> to vector<4x256xf32>
    %92 = arith.subf %91, %90 : vector<4x256xf32>
    %93 = arith.subf %80, %74 : vector<4x256xf32>
    %94 = vector.broadcast %3 : vector<4x1xf32> to vector<4x256xf32>
    %95 = arith.addf %94, %93 : vector<4x256xf32>
    %cst_33 = arith.constant 1.000000e+00 : f32
    %96 = vector.broadcast %cst_33 : f32 to vector<4x256xf32>
    %97 = arith.maximumf %95, %96 : vector<4x256xf32>
    %98 = arith.divf %92, %97 : vector<4x256xf32>
    %cst_34 = arith.constant 1.000000e+00 : f32
    %99 = vector.broadcast %cst_34 : f32 to vector<4x256xf32>
    %100 = arith.subf %99, %98 : vector<4x256xf32>
    %101 = arith.subf %89, %100 : vector<4x256xf32>
    %102 = arith.mulf %66, %101 : vector<4x256xf32>
    %cst_35 = arith.constant dense<0.000000e+00> : vector<4xf32>
    %103 = vector.multi_reduction <add>, %102, %cst_35 [1] : vector<4x256xf32> to vector<4xf32>
    %104 = vector.shape_cast %103 : vector<4xf32> to vector<4x1xf32>
    %105 = arith.addf %55, %104 : vector<4x1xf32>
    %cst_36 = arith.constant dense<0.000000e+00> : vector<4xf32>
    %106 = vector.multi_reduction <add>, %70, %cst_36 [1] : vector<4x256xf32> to vector<4xf32>
    %107 = vector.shape_cast %106 : vector<4xf32> to vector<4x1xf32>
    %108 = arith.addf %58, %107 : vector<4x1xf32>
    %cst_37 = arith.constant dense<0.000000e+00> : vector<4xf32>
    %109 = vector.multi_reduction <add>, %74, %cst_37 [1] : vector<4x256xf32> to vector<4xf32>
    %110 = vector.shape_cast %109 : vector<4xf32> to vector<4x1xf32>
    %111 = arith.addf %61, %110 : vector<4x1xf32>
    %c0_38 = arith.constant 0 : index
    %c0_39 = arith.constant 0 : index
    %112 = vector.load %arg5[%c0_38, %c0_39] : memref<4x1xf32, #tpu.memory_space<vmem>>, vector<4x1xf32>
    tpu.vector_store %arg5[%c0_38, %c0_39], %108 {strides = array<i32>} : memref<4x1xf32, #tpu.memory_space<vmem>>, vector<4x1xf32>,
    %c0_40 = arith.constant 0 : index
    %c0_41 = arith.constant 0 : index
    %113 = vector.load %arg6[%c0_40, %c0_41] : memref<4x1xf32, #tpu.memory_space<vmem>>, vector<4x1xf32>
    tpu.vector_store %arg6[%c0_40, %c0_41], %111 {strides = array<i32>} : memref<4x1xf32, #tpu.memory_space<vmem>>, vector<4x1xf32>,
    %c0_42 = arith.constant 0 : index
    %c0_43 = arith.constant 0 : index
    %114 = vector.load %arg7[%c0_42, %c0_43] : memref<4x1xf32, #tpu.memory_space<vmem>>, vector<4x1xf32>
    tpu.vector_store %arg7[%c0_42, %c0_43], %105 {strides = array<i32>} : memref<4x1xf32, #tpu.memory_space<vmem>>, vector<4x1xf32>,
    %c0_i32_44 = arith.constant 0 : i32
    %115 = arith.cmpi eq, %arg0, %c0_i32_44 : i32
    %116 = arith.extui %115 : i1 to i32
    %c0_i32_45 = arith.constant 0 : i32
    %117 = arith.cmpi ne, %116, %c0_i32_45 : i32
    scf.if %117 {
      %cst_46 = arith.constant 0.000000e+00 : f32
      %118 = vector.broadcast %cst_46 : f32 to vector<4x1xf32>
      %119 = arith.cmpf ogt, %3, %118 : vector<4x1xf32>
      %120 = arith.extui %119 : vector<4x1xi1> to vector<4x1xi32>
      %121 = arith.sitofp %120 : vector<4x1xi32> to vector<4x1xf32>
      %122 = arith.mulf %105, %121 : vector<4x1xf32>
      %123 = vector.shape_cast %122 : vector<4x1xf32> to vector<1x4x1xf32>
      %cst_47 = arith.constant dense<0.000000e+00> : vector<1xf32>
      %124 = vector.multi_reduction <add>, %123, %cst_47 [1, 2] : vector<1x4x1xf32> to vector<1xf32>
      %125 = vector.shape_cast %124 : vector<1xf32> to vector<1x1x1xf32>
      %126 = vector.extract %125[0, 0, 0] : f32 from vector<1x1x1xf32>
      %127 = vector.shape_cast %121 : vector<4x1xf32> to vector<1x4x1xf32>
      %cst_48 = arith.constant dense<0.000000e+00> : vector<1xf32>
      %128 = vector.multi_reduction <add>, %127, %cst_48 [1, 2] : vector<1x4x1xf32> to vector<1xf32>
      %129 = vector.shape_cast %128 : vector<1xf32> to vector<1x1x1xf32>
      %130 = vector.extract %129[0, 0, 0] : f32 from vector<1x1x1xf32>
      %cst_49 = arith.constant 1.000000e+00 : f32
      %131 = arith.maximumf %130, %cst_49 : f32
      %132 = arith.divf %126, %131 : f32
      %c0_50 = arith.constant 0 : index
      %c0_51 = arith.constant 0 : index
      %133 = memref.load %arg4[%c0_50, %c0_51] : memref<1x1xf32, #tpu.memory_space<smem>>
      memref.store %132, %arg4[%c0_50, %c0_51] : memref<1x1xf32, #tpu.memory_space<smem>>
    } else {
    }
    return
  }
  func.func @transform_0(%arg0: i32) -> (i32, i32) {
    %c0_i32 = arith.constant 0 : i32
    %c0_i32_0 = arith.constant 0 : i32
    %c0_i32_1 = arith.constant 0 : i32
    return %c0_i32, %c0_i32_0 : i32, i32
  }
  func.func @transform_1(%arg0: i32) -> (i32, i32) {
    %c0_i32 = arith.constant 0 : i32
    %c0_i32_0 = arith.constant 0 : i32
    return %c0_i32, %arg0 : i32, i32
  }
  func.func @transform_2(%arg0: i32) -> (i32, i32) {
    %c0_i32 = arith.constant 0 : i32
    %c0_i32_0 = arith.constant 0 : i32
    return %c0_i32, %arg0 : i32, i32
  }
  func.func @transform_3(%arg0: i32) -> (i32, i32) {
    %c0_i32 = arith.constant 0 : i32
    %c0_i32_0 = arith.constant 0 : i32
    %c0_i32_1 = arith.constant 0 : i32
    return %c0_i32, %c0_i32_0 : i32, i32
  }
}

</mosaic_0001>

<llo_original>
// kernel: eq.12
$region0: #{eq.12}
  %s0 = inlined_call_operand.vmem [shape: s32[2,16,16], index: 0, kind: input, shape index: {}]
  %s1 = inlined_call_operand.vmem [shape: s32[512], index: 1, kind: output, shape index: {}]
  $region1: #{eq.12} parent=0
    #allocation0 [shape = 'u8[4096]{0}', space=vmem, size = 0x1000, scoped, tag = 'scoped mem for output reshape']
    %v2 = vld [vmem:[%s0] ss:$8 sm:$0xf]
    %vm3 = vcmask 130048
    %4 = vst.msk [vmem:[#allocation0] sm:$0xf] %vm3, %v2
    %s5 = scalar_lea.vmem %s0, 7
    %v6 = vld [vmem:[%s5] ss:$8 sm:$0xf]
    %7 = vrot.lane.b32.xlu0 %v6, 112
    %v8 = vpop.permute.xlu0 %7
    %vm9 = vcmask 1048448
    %10 = vst.msk [vmem:[#allocation0] sm:$0xf] %vm9, %v8
    %s11 = scalar_lea.vmem %s0, 6
    %v12 = vld [vmem:[%s11] ss:$8 sm:$0xf]
    %13 = vrot.lane.b32.xlu0 %v12, 96
    %v14 = vpop.permute.xlu0 %13
    %vm15 = vcmask 917248
    %16 = vst.msk [vmem:[#allocation0] sm:$0xf] %vm15, %v14
    %s17 = scalar_lea.vmem %s0, 5
    %v18 = vld [vmem:[%s17] ss:$8 sm:$0xf]
    %19 = vrot.lane.b32.xlu0 %v18, 80
    %v20 = vpop.permute.xlu0 %19
    %vm21 = vcmask 786048
    %22 = vst.msk [vmem:[#allocation0] sm:$0xf] %vm21, %v20
    %s23 = scalar_lea.vmem %s0, 4
    %v24 = vld [vmem:[%s23] ss:$8 sm:$0xf]
    %25 = vrot.lane.b32.xlu0 %v24, 64
    %v26 = vpop.permute.xlu0 %25
    %vm27 = vcmask 654848
    %28 = vst.msk [vmem:[#allocation0] sm:$0xf] %vm27, %v26
    %s29 = scalar_lea.vmem %s0, 3
    %v30 = vld [vmem:[%s29] ss:$8 sm:$0xf]
    %31 = vrot.lane.b32.xlu0 %v30, 48
    %v32 = vpop.permute.xlu0 %31
    %vm33 = vcmask 523648
    %34 = vst.msk [vmem:[#allocation0] sm:$0xf] %vm33, %v32
    %s35 = scalar_lea.vmem %s0, 2
    %v36 = vld [vmem:[%s35] ss:$8 sm:$0xf]
    %37 = vrot.lane.b32.xlu0 %v36, 32
    %v38 = vpop.permute.xlu0 %37
    %vm39 = vcmask 392448
    %40 = vst.msk [vmem:[#allocation0] sm:$0xf] %vm39, %v38
    %s41 = scalar_lea.vmem %s0, 1
    %v42 = vld [vmem:[%s41] ss:$8 sm:$0xf]
    %43 = vrot.lane.b32.xlu0 %v42, 16
    %v44 = vpop.permute.xlu0 %43
    %vm45 = vcmask 261248
    %46 = vst.msk [vmem:[#allocation0] sm:$0xf] %vm45, %v44
    %s48 = sshllo.u32 0, 4
    %v50 = vld [vmem:[#allocation0] sm:%s48]
    %s51 = sshllo.u32 0, 4
    %52 = vst [vmem:[%s1] sm:%s51] %v50

// kernel: _lambda_.2
$region0: #{_lambda_.2}
  #allocation0 [shape = 'u32[]', space=smem, size = 0x4, offset = 0x4, fixed_abs, tag = 'smem constant byte address 0x4 - core index']
  #allocation1 [shape = 'u32[144,128]{1,0:T(1,128)}', space=vmem, size = 0x12000, scoped, tag = 'internal scratch']
  %s0 = inlined_call_operand.hbm [shape: f32[2,4,8,8], index: 0, kind: input, shape index: {}]
  %s1 = inlined_call_operand.hbm [shape: f32[16,8], index: 1, kind: input, shape index: {}]
  %s2 = inlined_call_operand.hbm [shape: f32[8,16], index: 2, kind: input, shape index: {}]
  %s3 = inlined_call_operand.hbm [shape: s32[2,16,16], index: 3, kind: input, shape index: {}]
  %s4 = inlined_call_operand.vmem [shape: f32[4,2,16,16], index: 4, kind: output, shape index: {0}]
  %s5 = inlined_call_operand.vmem [shape: bf16[4,2,16,16], index: 5, kind: output, shape index: {1}]
  %6 = xla_tuple %s4, %s5
  %s7 = sld [smem:[#allocation0]]
  $region144: #{_lambda_.2} parent=0
    _
  %s9 = ssub.s32 1, %s7
  %s10 = scalar_select 0, %s9, %s7
  $region1: #{_lambda_.2} parent=0
    #allocation2 [shape = 'u8[32768]{0}', space=vmem, size = 0x8000, scoped, tag = 'input window, operand 0']
    #allocation3 [shape = 's32[2]{0}', space=sflag, size = 0x8, scoped, tag = 'scoped memory for _lambda_.2']
    #allocation4 [shape = 'u8[8192]{0}', space=vmem, size = 0x2000, scoped, tag = 'input window, operand 1, single buffered']
    #allocation5 [shape = 's32[1]{0}', space=sflag, size = 0x4, scoped, tag = 'scoped memory for _lambda_.2']
    #allocation6 [shape = 'u8[4096]{0}', space=vmem, size = 0x1000, scoped, tag = 'input window, operand 2, single buffered']
    #allocation7 [shape = 'u8[16384]{0}', space=vmem, size = 0x4000, scoped, tag = 'input window, operand 3']
    #allocation8 [shape = 's32[2]{0}', space=sflag, size = 0x8, scoped, tag = 'scoped memory for _lambda_.2']
    #allocation9 [shape = 'u8[65536]{0}', space=vmem, size = 0x10000, scoped, tag = 'output window, operand 0']
    #allocation10 [shape = 'u8[32768]{0}', space=vmem, size = 0x8000, scoped, tag = 'output window, operand 1']
    %11 = vsyncpa [#allocation3], 0
    %s12 = scalar_lea.sflag [#allocation3], 1
    %13 = vsyncpa %s12, 0
    %14 = vsyncpa [#allocation5], 0
    %15 = vsyncpa [#allocation8], 0
    %s16 = scalar_lea.sflag [#allocation8], 1
    %17 = vsyncpa %s16, 0
    loop: start=0, step=1, limit=4
    $region2: #{_lambda_.2} parent=1 // loop_pre_header
      _
    $region3: #{_lambda_.2} parent=1 // loop_header
      %s19 = sphi 0, %s23
      %p20 = scmp.ge.s32.totalorder %s19, 4
      %s26 = sphi 0, %s38
      %s27 = sphi 0, %s34
      %s28 = sphi 0, %s26
      %s29 = sphi 0, %s27
      %s30 = sphi 0, %s28
      %s31 = sphi 0, %s29
      %s41 = sphi 0, %s43
      %s44 = sphi 0, %s41
      %s45 = sphi 0, %s44
      %s61 = sphi 0, %s45
      %s67 = sphi 0, %s69
      %s70 = sphi 0, %s67
      %s71 = sphi 0, %s70
      %s87 = sphi 0, %s71
      %s91 = sphi 0, %s91
      %s93 = sphi 0, %s91
      %s94 = sphi 0, %s93
      %s108 = sphi 0, %s94
      %s116 = sphi 0, %s118
      %s119 = sphi 0, %s116
      %s120 = sphi 0, %s119
      %s136 = sphi 0, %s120
      %s144 = sphi 0, %s146
      %s147 = sphi 0, %s144
      %s148 = sphi 0, %s147
      %s164 = sphi 0, %s148
      %s172 = sphi 0, %s174
      %s175 = sphi 0, %s172
      %s176 = sphi 0, %s175
      %s192 = sphi 0, %s176
    $region4: #{_lambda_.2} parent=1 // loop_header_branch
      %22 = sbr.rel (%p20) target = $region8
    $region5: #{_lambda_.2} parent=1 // loop_body
      %s24 = ssub.s32 %s19, 1
      %s25 = ssub.s32 %s19, 2
      %s32 = sadd.s32 1, %s27
      %p33 = scmp.ge.s32.totalorder %s32, 1
      %s34 = scalar_select %p33, 0, %s32
      %s35 = sadd.s32 1, %s26
      %s36 = scalar_select %p33, %s35, %s26
      %p37 = scmp.ge.s32.totalorder %s36, 2
      %s38 = scalar_select %p37, 0, %s36
      %s39 = ssub.s32 %s26, %s38
      %p40 = scmp.eq.s32.totalorder %s39, 0
      %s42 = sadd.s32 %s41, 1
      %s43 = scalar_select %p40, %s41, %s42
      %p46 = pneg %p40
      %p47 = scmp.eq.s32.totalorder %s19, 1
      %p48 = por %p46, %p47
      %p49 = scmp.ne.s32.totalorder %s41, %s44
      %p50 = scmp.eq.s32.totalorder %s19, 0
      %p51 = por %p49, %p50
      %p52 = scmp.ne.s32.totalorder %s41, %s44
      %p53 = scmp.eq.s32.totalorder %s24, 1
      %p54 = por %p52, %p53
      %p55 = scmp.ne.s32.totalorder %s44, %s45
      %p56 = scmp.eq.s32.totalorder %s24, 0
      %p57 = por %p55, %p56
      %p58 = scmp.ne.s32.totalorder %s44, %s45
      %p59 = scmp.eq.s32.totalorder %s25, 1
      %p60 = por %p58, %p59
      %p62 = scmp.ne.s32.totalorder %s45, %s61
      %p63 = scmp.eq.s32.totalorder %s25, 0
      %p64 = por %p62, %p63
      %s65 = ssub.s32 %s27, %s34
      %p66 = scmp.eq.s32.totalorder %s65, 0
      %s68 = sadd.s32 %s67, 1
      %s69 = scalar_select %p66, %s67, %s68
      %p72 = pneg %p66
      %p73 = scmp.eq.s32.totalorder %s19, 1
      %p74 = por %p72, %p73
      %p75 = scmp.ne.s32.totalorder %s67, %s70
      %p76 = scmp.eq.s32.totalorder %s19, 0
      %p77 = por %p75, %p76
      %p78 = scmp.ne.s32.totalorder %s67, %s70
      %p79 = scmp.eq.s32.totalorder %s24, 1
      %p80 = por %p78, %p79
      %p81 = scmp.ne.s32.totalorder %s70, %s71
      %p82 = scmp.eq.s32.totalorder %s24, 0
      %p83 = por %p81, %p82
      %p84 = scmp.ne.s32.totalorder %s70, %s71
      %p85 = scmp.eq.s32.totalorder %s25, 1
      %p86 = por %p84, %p85
      %p88 = scmp.ne.s32.totalorder %s71, %s87
      %p89 = scmp.eq.s32.totalorder %s25, 0
      %p90 = por %p88, %p89
      %s92 = sadd.s32 %s91, 1
      %p95 = scmp.eq.s32.totalorder %s19, 1
      %p96 = scmp.ne.s32.totalorder %s91, %s93
      %p97 = scmp.eq.s32.totalorder %s19, 0
      %p98 = por %p96, %p97
      %p99 = scmp.ne.s32.totalorder %s91, %s93
      %p100 = scmp.eq.s32.totalorder %s24, 1
      %p101 = por %p99, %p100
      %p102 = scmp.ne.s32.totalorder %s93, %s94
      %p103 = scmp.eq.s32.totalorder %s24, 0
      %p104 = por %p102, %p103
      %p105 = scmp.ne.s32.totalorder %s93, %s94
      %p106 = scmp.eq.s32.totalorder %s25, 1
      %p107 = por %p105, %p106
      %p109 = scmp.ne.s32.totalorder %s94, %s108
      %p110 = scmp.eq.s32.totalorder %s25, 0
      %p111 = por %p109, %p110
      %s112 = ssub.s32 %s26, %s38
      %s113 = ssub.s32 %s27, %s34
      %s114 = sor.u32 %s112, %s113
      %p115 = scmp.eq.s32.totalorder %s114, 0
      %s117 = sadd.s32 %s116, 1
      %s118 = scalar_select %p115, %s116, %s117
      %p121 = pneg %p115
      %p122 = scmp.eq.s32.totalorder %s19, 1
      %p123 = por %p121, %p122
      %p124 = scmp.ne.s32.totalorder %s116, %s119
      %p125 = scmp.eq.s32.totalorder %s19, 0
      %p126 = por %p124, %p125
      %p127 = scmp.ne.s32.totalorder %s116, %s119
      %p128 = scmp.eq.s32.totalorder %s24, 1
      %p129 = por %p127, %p128
      %p130 = scmp.ne.s32.totalorder %s119, %s120
      %p131 = scmp.eq.s32.totalorder %s24, 0
      %p132 = por %p130, %p131
      %p133 = scmp.ne.s32.totalorder %s119, %s120
      %p134 = scmp.eq.s32.totalorder %s25, 1
      %p135 = por %p133, %p134
      %p137 = scmp.ne.s32.totalorder %s120, %s136
      %p138 = scmp.eq.s32.totalorder %s25, 0
      %p139 = por %p137, %p138
      %s140 = ssub.s32 %s26, %s38
      %s141 = ssub.s32 %s27, %s34
      %s142 = sor.u32 %s140, %s141
      %p143 = scmp.eq.s32.totalorder %s142, 0
      %s145 = sadd.s32 %s144, 1
      %s146 = scalar_select %p143, %s144, %s145
      %p149 = pneg %p143
      %p150 = scmp.eq.s32.totalorder %s19, 1
      %p151 = por %p149, %p150
      %p152 = scmp.ne.s32.totalorder %s144, %s147
      %p153 = scmp.eq.s32.totalorder %s19, 0
      %p154 = por %p152, %p153
      %p155 = scmp.ne.s32.totalorder %s144, %s147
      %p156 = scmp.eq.s32.totalorder %s24, 1
      %p157 = por %p155, %p156
      %p158 = scmp.ne.s32.totalorder %s147, %s148
      %p159 = scmp.eq.s32.totalorder %s24, 0
      %p160 = por %p158, %p159
      %p161 = scmp.ne.s32.totalorder %s147, %s148
      %p162 = scmp.eq.s32.totalorder %s25, 1
      %p163 = por %p161, %p162
      %p165 = scmp.ne.s32.totalorder %s148, %s164
      %p166 = scmp.eq.s32.totalorder %s25, 0
      %p167 = por %p165, %p166
      %s168 = ssub.s32 %s26, %s38
      %s169 = ssub.s32 %s27, %s34
      %s170 = sor.u32 %s168, %s169
      %p171 = scmp.eq.s32.totalorder %s170, 0
      %s173 = sadd.s32 %s172, 1
      %s174 = scalar_select %p171, %s172, %s173
      %p177 = pneg %p171
      %p178 = scmp.eq.s32.totalorder %s19, 1
      %p179 = por %p177, %p178
      %p180 = scmp.ne.s32.totalorder %s172, %s175
      %p181 = scmp.eq.s32.totalorder %s19, 0
      %p182 = por %p180, %p181
      %p183 = scmp.ne.s32.totalorder %s172, %s175
      %p184 = scmp.eq.s32.totalorder %s24, 1
      %p185 = por %p183, %p184
      %p186 = scmp.ne.s32.totalorder %s175, %s176
      %p187 = scmp.eq.s32.totalorder %s24, 0
      %p188 = por %p186, %p187
      %p189 = scmp.ne.s32.totalorder %s175, %s176
      %p190 = scmp.eq.s32.totalorder %s25, 1
      %p191 = por %p189, %p190
      %p193 = scmp.ne.s32.totalorder %s176, %s192
      %p194 = scmp.eq.s32.totalorder %s25, 0
      %p195 = por %p193, %p194
      %p196 = scmp.le.s32.totalorder 1, %s19
      %p197 = scmp.lt.s32.totalorder %s19, 3
      %p198 = pnand %p196, %p197
      %p199 = pneg %p198
      // Predicated region
      $region9: #{_lambda_.2} parent=5 // pred_check
        _
      $region10: #{_lambda_.2} parent=5 // pred_check_branch
        %201 = sbr.rel (%p198) target = $region12
      $region11: #{_lambda_.2} parent=5 // pred_region
        %s202 = ssub.s32 %s19, 1
        // Predicated region
        $region13: #{_lambda_.2} parent=11 // pred_check
          %p203 = pneg %p83
        $region14: #{_lambda_.2} parent=11 // pred_check_branch
          %205 = sbr.rel (%p203) target = $region16
        $region15: #{_lambda_.2} parent=11 // pred_region
          %s206 = smul.u32 2, %s29
          %s208 = ssub.s32 256, 256
          %209 = vsyncadd [#allocation5], %s208
          %s210 = smul.addr %s206, 128
          %s211 = scalar_lea.hbm %s1, %s210
          %s212 = sshll.u32 [#allocation4], 4
          %s213 = int_to_ptr.vmem [resolvable:$true] %s212
          %218 = dma.hbm_to_vmem [thread:$0]  %s211, 256, %s213, [#allocation5], 128, 128, 8
        $region16: #{_lambda_.2} parent=11 // pred_fallthru
          _
        // Predicated region
        $region17: #{_lambda_.2} parent=11 // pred_check
          %p219 = pneg %p104
        $region18: #{_lambda_.2} parent=11 // pred_check_branch
          %221 = sbr.rel (%p219) target = $region20
        $region19: #{_lambda_.2} parent=11 // pred_region
          %s223 = ssub.s32 128, 128
          %224 = vsyncadd [#allocation5], %s223
          %s226 = sshll.u32 [#allocation6], 4
          %s227 = int_to_ptr.vmem [resolvable:$true] %s226
          %229 = dma.hbm_to_vmem [thread:$0]  %s2, 128, %s227, [#allocation5]
        $region20: #{_lambda_.2} parent=11 // pred_fallthru
          _
      $region12: #{_lambda_.2} parent=5 // pred_fallthru
        _
      %p230 = scmp.lt.s32.totalorder %s19, 2
      // Predicated region
      $region21: #{_lambda_.2} parent=5 // pred_check
        %p231 = pneg %p230
      $region22: #{_lambda_.2} parent=5 // pred_check_branch
        %233 = sbr.rel (%p231) target = $region24
      $region23: #{_lambda_.2} parent=5 // pred_region
        // Predicated region
        $region25: #{_lambda_.2} parent=23 // pred_check
          %p234 = pneg %p51
        $region26: #{_lambda_.2} parent=23 // pred_check_branch
          %236 = sbr.rel (%p234) target = $region28
        $region27: #{_lambda_.2} parent=23 // pred_region
          %s237 = sand.u32 %s41, 1
          %s238 = scalar_lea.sflag [#allocation3], %s237
          %s239 = sand.u32 %s41, 1
          %s240 = smul.addr %s239, 32
          %s241 = scalar_lea.vmem [#allocation2], %s240
          %s243 = ssub.s32 512, 512
          %244 = vsyncadd %s238, %s243
          %s245 = smul.addr %s26, 4
          %s246 = smul.addr %s245, 128
          %s247 = scalar_lea.hbm %s0, %s246
          %s248 = sshll.u32 %s241, 4
          %s249 = int_to_ptr.vmem [resolvable:$true] %s248
          %254 = dma.hbm_to_vmem [thread:$0]  %s247, 512, %s249, %s238, 128, 128, 8
        $region28: #{_lambda_.2} parent=23 // pred_fallthru
          _
        // Predicated region
        $region29: #{_lambda_.2} parent=23 // pred_check
          %p255 = pneg %p126
        $region30: #{_lambda_.2} parent=23 // pred_check_branch
          %257 = sbr.rel (%p255) target = $region32
        $region31: #{_lambda_.2} parent=23 // pred_region
          %s258 = sand.u32 %s116, 1
          %s259 = scalar_lea.sflag [#allocation8], %s258
          %s260 = sand.u32 %s116, 1
          %s261 = smul.addr %s260, 16
          %s262 = scalar_lea.vmem [#allocation7], %s261
          %s263 = smul.u32 2, %s27
          %s265 = ssub.s32 256, 256
          %266 = vsyncadd %s259, %s265
          %s267 = smul.addr %s26, 2
          %s268 = sadd.s32 %s263, %s267
          %s269 = smul.addr %s268, 128
          %s270 = scalar_lea.hbm %s3, %s269
          %s271 = sshll.u32 %s262, 4
          %s272 = int_to_ptr.vmem [resolvable:$true] %s271
          %277 = dma.hbm_to_vmem [thread:$0]  %s270, 256, %s272, %s259, 128, 128, 8
        $region32: #{_lambda_.2} parent=23 // pred_fallthru
          _
      $region24: #{_lambda_.2} parent=5 // pred_fallthru
        _
      %p278 = scmp.le.s32.totalorder 1, %s19
      %p279 = scmp.lt.s32.totalorder %s19, 3
      %p280 = pnand %p278, %p279
      %p281 = pneg %p280
      // Predicated region
      $region33: #{_lambda_.2} parent=5 // pred_check
        _
      $region34: #{_lambda_.2} parent=5 // pred_check_branch
        %283 = sbr.rel (%p280) target = $region36
      $region35: #{_lambda_.2} parent=5 // pred_region
        %s284 = ssub.s32 %s19, 1
        %s285 = sand.u32 %s44, 1
        %s286 = scalar_lea.sflag [#allocation3], %s285
        %s287 = sand.u32 %s44, 1
        %s288 = smul.addr %s287, 32
        %s289 = scalar_lea.vmem [#allocation2], %s288
        // Predicated region
        $region37: #{_lambda_.2} parent=35 // pred_check
          %p290 = pneg %p57
        $region38: #{_lambda_.2} parent=35 // pred_check_branch
          %292 = sbr.rel (%p290) target = $region40
        $region39: #{_lambda_.2} parent=35 // pred_region
          %293 = dma.done %s286, 512
        $region40: #{_lambda_.2} parent=35 // pred_fallthru
          _
        // Predicated region
        $region41: #{_lambda_.2} parent=35 // pred_check
          %p294 = pneg %p83
        $region42: #{_lambda_.2} parent=35 // pred_check_branch
          %296 = sbr.rel (%p294) target = $region44
        $region43: #{_lambda_.2} parent=35 // pred_region
          %297 = dma.done [#allocation5], 256
        $region44: #{_lambda_.2} parent=35 // pred_fallthru
          _
        // Predicated region
        $region45: #{_lambda_.2} parent=35 // pred_check
          %p298 = pneg %p104
        $region46: #{_lambda_.2} parent=35 // pred_check_branch
          %300 = sbr.rel (%p298) target = $region48
        $region47: #{_lambda_.2} parent=35 // pred_region
          %301 = dma.done [#allocation5], 128
        $region48: #{_lambda_.2} parent=35 // pred_fallthru
          _
        %s302 = sand.u32 %s119, 1
        %s303 = scalar_lea.sflag [#allocation8], %s302
        %s304 = sand.u32 %s119, 1
        %s305 = smul.addr %s304, 16
        %s306 = scalar_lea.vmem [#allocation7], %s305
        // Predicated region
        $region49: #{_lambda_.2} parent=35 // pred_check
          %p307 = pneg %p132
        $region50: #{_lambda_.2} parent=35 // pred_check_branch
          %309 = sbr.rel (%p307) target = $region52
        $region51: #{_lambda_.2} parent=35 // pred_region
          %310 = dma.done %s303, 256
        $region52: #{_lambda_.2} parent=35 // pred_fallthru
          _
        %s311 = sand.u32 %s44, 1
        %s312 = scalar_lea.sflag [#allocation3], %s311
        %s313 = sand.u32 %s44, 1
        %s314 = smul.addr %s313, 32
        %s315 = scalar_lea.vmem [#allocation2], %s314
        %p316 = pneg %p57
        %p317 = pneg %p54
        %p318 = pneg %p83
        %p319 = pneg %p80
        %p320 = pneg %p104
        %p321 = pneg %p101
        %s322 = sand.u32 %s119, 1
        %s323 = scalar_lea.sflag [#allocation8], %s322
        %s324 = sand.u32 %s119, 1
        %s325 = smul.addr %s324, 16
        %s326 = scalar_lea.vmem [#allocation7], %s325
        %p327 = pneg %p132
        %p328 = pneg %p129
        %p329 = pneg %p160
        %p330 = pneg %p157
        %s331 = sand.u32 %s147, 1
        %s332 = sand.u32 %s147, 1
        %s333 = smul.addr %s332, 64
        %s334 = scalar_lea.vmem [#allocation9], %s333
        %p335 = pneg %p188
        %p336 = pneg %p185
        %s337 = sand.u32 %s175, 1
        %s338 = sand.u32 %s175, 1
        %s339 = smul.addr %s338, 32
        %s340 = scalar_lea.vmem [#allocation10], %s339
        %s341 = smul.u32 2, %s29
        %s342 = smul.u32 2, %s29
        %s343 = smul.u32 2, %s29
        %s344 = smul.u32 2, %s29
        %v345 = vld [vmem:[#allocation4] sm:$0xff]
        %v346 = vld [vmem:[#allocation4 + $0x8] sm:$0xff]
        %v347 = vld [vmem:[#allocation6] sm:$0xff]
        %v348 = vld [vmem:[%s306] sm:$0xff]
        %v349 = vld [vmem:[%s306 + $0x8] sm:$0xff]
        %v350 = vld [vmem:[%s289] sm:$0xff]
        %vm351 = vcmask 64512
        %v353 = vsel %vm351, %v350, 0
        %355 = vmatprep.subr.mxu0 0.0
        %356 = vmatpush1.msra.mxu0 %v347
        %357 = vmatprep.subr.mxu0 0.0
        %358 = vmatpush1.msra.mxu0 0.0
        %359 = vmatprep.subr.mxu0 0.0
        %360 = vmatpush1.msra.mxu0 0.0
        %361 = vmatprep.subr.mxu0 0.0
        %362 = vmatpush1.msra.mxu0 0.0
        %363 = vmatprep.subr.mxu0 0.0
        %364 = vmatpush1.msra.mxu0 0.0
        %365 = vmatprep.subr.mxu0 0.0
        %366 = vmatpush1.msra.mxu0 0.0
        %367 = vmatprep.subr.mxu0 0.0
        %368 = vmatpush1.msra.mxu0 0.0
        %369 = vmatprep.subr.mxu0 0.0
        %370 = vmatpush1.msra.mxu0 0.0
        %371 = vmatprep.subr.mxu0 0.0
        %372 = vmatpush1.msra.mxu0 0.0
        %373 = vmatprep.subr.mxu0 0.0
        %374 = vmatpush1.msra.mxu0 0.0
        %375 = vmatprep.subr.mxu0 0.0
        %376 = vmatpush1.msra.mxu0 0.0
        %377 = vmatprep.subr.mxu0 0.0
        %378 = vmatpush1.msra.mxu0 0.0
        %379 = vmatprep.subr.mxu0 0.0
        %380 = vmatpush1.msra.mxu0 0.0
        %381 = vmatprep.subr.mxu0 0.0
        %382 = vmatpush1.msra.mxu0 0.0
        %383 = vmatprep.subr.mxu0 0.0
        %384 = vmatpush1.msra.mxu0 0.0
        %385 = vmatprep.subr.mxu0 0.0
        %386 = vmatpush1.msra.mxu0 0.0
        %387 = vmatprep.subr.mxu0 0.0
        %388 = vmatpush1.msra.mxu0 0.0
        %389 = vmatprep.subr.mxu0 0.0
        %390 = vmatpush1.msra.mxu0 0.0
        %391 = vmatprep.subr.mxu0 0.0
        %392 = vmatpush1.msra.mxu0 0.0
        %393 = vmatprep.subr.mxu0 0.0
        %394 = vmatpush1.msra.mxu0 0.0
        %395 = vmatprep.subr.mxu0 0.0
        %396 = vmatpush1.msra.mxu0 0.0
        %397 = vmatprep.subr.mxu0 0.0
        %398 = vmatpush1.msra.mxu0 0.0
        %399 = vmatprep.subr.mxu0 0.0
        %400 = vmatpush1.msra.mxu0 0.0
        %401 = vmatprep.subr.mxu0 0.0
        %402 = vmatpush1.msra.mxu0 0.0
        %403 = vmatprep.subr.mxu0 0.0
        %404 = vmatpush1.msra.mxu0 0.0
        %405 = vmatprep.subr.mxu0 0.0
        %406 = vmatpush1.msra.mxu0 0.0
        %407 = vmatprep.subr.mxu0 0.0
        %408 = vmatpush1.msra.mxu0 0.0
        %409 = vmatprep.subr.mxu0 0.0
        %410 = vmatpush1.msra.mxu0 0.0
        %411 = vmatprep.subr.mxu0 0.0
        %412 = vmatpush1.msra.mxu0 0.0
        %413 = vmatprep.subr.mxu0 0.0
        %414 = vmatpush1.msra.mxu0 0.0
        %415 = vmatprep.subr.mxu0 0.0
        %416 = vmatpush1.msra.mxu0 0.0
        %417 = vmatprep.subr.mxu0 0.0
        %418 = vmatpush1.msra.mxu0 0.0
        %419 = vmatprep.mubr.f32.mxu0 0.0
        %420 = vmatmul.mubr.f32.gmra.mrb[0].mxu0 %v353
        %v421 = vpop.f32.mrb[0].mxu0
        %v422 = vadd.f32 0.0, %v421
        %v423 = vpop.f32.mrb[0].mxu0
        %424 = vdwg.mxu0
        %v426 = vsel %vm351, %v345, 0
        %v429 = vsel %vm351, %v346, 0
        %431 = vmatprep.subr.mxu0 0.0
        %432 = vmatpush1.msra.mxu0 %v422
        %433 = vmatprep.subr.mxu0 0.0
        %434 = vmatpush1.msra.mxu0 0.0
        %435 = vmatprep.subr.mxu0 0.0
        %436 = vmatpush1.msra.mxu0 0.0
        %437 = vmatprep.subr.mxu0 0.0
        %438 = vmatpush1.msra.mxu0 0.0
        %439 = vmatprep.subr.mxu0 0.0
        %440 = vmatpush1.msra.mxu0 0.0
        %441 = vmatprep.subr.mxu0 0.0
        %442 = vmatpush1.msra.mxu0 0.0
        %443 = vmatprep.subr.mxu0 0.0
        %444 = vmatpush1.msra.mxu0 0.0
        %445 = vmatprep.subr.mxu0 0.0
        %446 = vmatpush1.msra.mxu0 0.0
        %447 = vmatprep.subr.mxu0 0.0
        %448 = vmatpush1.msra.mxu0 0.0
        %449 = vmatprep.subr.mxu0 0.0
        %450 = vmatpush1.msra.mxu0 0.0
        %451 = vmatprep.subr.mxu0 0.0
        %452 = vmatpush1.msra.mxu0 0.0
        %453 = vmatprep.subr.mxu0 0.0
        %454 = vmatpush1.msra.mxu0 0.0
        %455 = vmatprep.subr.mxu0 0.0
        %456 = vmatpush1.msra.mxu0 0.0
        %457 = vmatprep.subr.mxu0 0.0
        %458 = vmatpush1.msra.mxu0 0.0
        %459 = vmatprep.subr.mxu0 0.0
        %460 = vmatpush1.msra.mxu0 0.0
        %461 = vmatprep.subr.mxu0 0.0
        %462 = vmatpush1.msra.mxu0 0.0
        %463 = vmatprep.subr.mxu0 0.0
        %464 = vmatpush1.msra.mxu0 0.0
        %465 = vmatprep.subr.mxu0 0.0
        %466 = vmatpush1.msra.mxu0 0.0
        %467 = vmatprep.subr.mxu0 0.0
        %468 = vmatpush1.msra.mxu0 0.0
        %469 = vmatprep.subr.mxu0 0.0
        %470 = vmatpush1.msra.mxu0 0.0
        %471 = vmatprep.subr.mxu0 0.0
        %472 = vmatpush1.msra.mxu0 0.0
        %473 = vmatprep.subr.mxu0 0.0
        %474 = vmatpush1.msra.mxu0 0.0
        %475 = vmatprep.subr.mxu0 0.0
        %476 = vmatpush1.msra.mxu0 0.0
        %477 = vmatprep.subr.mxu0 0.0
        %478 = vmatpush1.msra.mxu0 0.0
        %479 = vmatprep.subr.mxu0 0.0
        %480 = vmatpush1.msra.mxu0 0.0
        %481 = vmatprep.subr.mxu0 0.0
        %482 = vmatpush1.msra.mxu0 0.0
        %483 = vmatprep.subr.mxu0 0.0
        %484 = vmatpush1.msra.mxu0 0.0
        %485 = vmatprep.subr.mxu0 0.0
        %486 = vmatpush1.msra.mxu0 0.0
        %487 = vmatprep.subr.mxu0 0.0
        %488 = vmatpush1.msra.mxu0 0.0
        %489 = vmatprep.subr.mxu0 0.0
        %490 = vmatpush1.msra.mxu0 0.0
        %491 = vmatprep.subr.mxu0 0.0
        %492 = vmatpush1.msra.mxu0 0.0
        %493 = vmatprep.subr.mxu0 0.0
        %494 = vmatpush1.msra.mxu0 0.0
        %495 = vmatprep.mubr.f32.mxu0 0.0
        %496 = vmatmul.mubr.f32.gmra.mrb[0].mxu0 %v426
        %v497 = vpop.f32.mrb[0].mxu0
        %v498 = vadd.f32 0.0, %v497
        %v499 = vpop.f32.mrb[0].mxu0
        %500 = vmatprep.mubr.f32.mxu0 0.0
        %501 = vmatmul.mubr.f32.gmra.mrb[0].mxu0 %v429
        %v502 = vpop.f32.mrb[0].mxu0
        %v503 = vadd.f32 0.0, %v502
        %v504 = vpop.f32.mrb[0].mxu0
        %505 = vdwg.mxu0
        %s506 = scalar_lea.vmem %s289, 8 [#allocation2]
        %v507 = vld [vmem:[%s506] sm:$0xff]
        %v509 = vsel %vm351, %v507, 0
        %511 = vmatprep.subr.mxu0 0.0
        %512 = vmatpush1.msra.mxu0 %v347
        %513 = vmatprep.subr.mxu0 0.0
        %514 = vmatpush1.msra.mxu0 0.0
        %515 = vmatprep.subr.mxu0 0.0
        %516 = vmatpush1.msra.mxu0 0.0
        %517 = vmatprep.subr.mxu0 0.0
        %518 = vmatpush1.msra.mxu0 0.0
        %519 = vmatprep.subr.mxu0 0.0
        %520 = vmatpush1.msra.mxu0 0.0
        %521 = vmatprep.subr.mxu0 0.0
        %522 = vmatpush1.msra.mxu0 0.0
        %523 = vmatprep.subr.mxu0 0.0
        %524 = vmatpush1.msra.mxu0 0.0
        %525 = vmatprep.subr.mxu0 0.0
        %526 = vmatpush1.msra.mxu0 0.0
        %527 = vmatprep.subr.mxu0 0.0
        %528 = vmatpush1.msra.mxu0 0.0
        %529 = vmatprep.subr.mxu0 0.0
        %530 = vmatpush1.msra.mxu0 0.0
        %531 = vmatprep.subr.mxu0 0.0
        %532 = vmatpush1.msra.mxu0 0.0
        %533 = vmatprep.subr.mxu0 0.0
        %534 = vmatpush1.msra.mxu0 0.0
        %535 = vmatprep.subr.mxu0 0.0
        %536 = vmatpush1.msra.mxu0 0.0
        %537 = vmatprep.subr.mxu0 0.0
        %538 = vmatpush1.msra.mxu0 0.0
        %539 = vmatprep.subr.mxu0 0.0
        %540 = vmatpush1.msra.mxu0 0.0
        %541 = vmatprep.subr.mxu0 0.0
        %542 = vmatpush1.msra.mxu0 0.0
        %543 = vmatprep.subr.mxu0 0.0
        %544 = vmatpush1.msra.mxu0 0.0
        %545 = vmatprep.subr.mxu0 0.0
        %546 = vmatpush1.msra.mxu0 0.0
        %547 = vmatprep.subr.mxu0 0.0
        %548 = vmatpush1.msra.mxu0 0.0
        %549 = vmatprep.subr.mxu0 0.0
        %550 = vmatpush1.msra.mxu0 0.0
        %551 = vmatprep.subr.mxu0 0.0
        %552 = vmatpush1.msra.mxu0 0.0
        %553 = vmatprep.subr.mxu0 0.0
        %554 = vmatpush1.msra.mxu0 0.0
        %555 = vmatprep.subr.mxu0 0.0
        %556 = vmatpush1.msra.mxu0 0.0
        %557 = vmatprep.subr.mxu0 0.0
        %558 = vmatpush1.msra.mxu0 0.0
        %559 = vmatprep.subr.mxu0 0.0
        %560 = vmatpush1.msra.mxu0 0.0
        %561 = vmatprep.subr.mxu0 0.0
        %562 = vmatpush1.msra.mxu0 0.0
        %563 = vmatprep.subr.mxu0 0.0
        %564 = vmatpush1.msra.mxu0 0.0
        %565 = vmatprep.subr.mxu0 0.0
        %566 = vmatpush1.msra.mxu0 0.0
        %567 = vmatprep.subr.mxu0 0.0
        %568 = vmatpush1.msra.mxu0 0.0
        %569 = vmatprep.subr.mxu0 0.0
        %570 = vmatpush1.msra.mxu0 0.0
        %571 = vmatprep.subr.mxu0 0.0
        %572 = vmatpush1.msra.mxu0 0.0
        %573 = vmatprep.subr.mxu0 0.0
        %574 = vmatpush1.msra.mxu0 0.0
        %575 = vmatprep.mubr.f32.mxu0 0.0
        %576 = vmatmul.mubr.f32.gmra.mrb[0].mxu0 %v509
        %v577 = vpop.f32.mrb[0].mxu0
        %v578 = vadd.f32 0.0, %v577
        %v579 = vpop.f32.mrb[0].mxu0
        %580 = vdwg.mxu0
        %581 = vmatprep.subr.mxu0 0.0
        %582 = vmatpush1.msra.mxu0 %v578
        %583 = vmatprep.subr.mxu0 0.0
        %584 = vmatpush1.msra.mxu0 0.0
        %585 = vmatprep.subr.mxu0 0.0
        %586 = vmatpush1.msra.mxu0 0.0
        %587 = vmatprep.subr.mxu0 0.0
        %588 = vmatpush1.msra.mxu0 0.0
        %589 = vmatprep.subr.mxu0 0.0
        %590 = vmatpush1.msra.mxu0 0.0
        %591 = vmatprep.subr.mxu0 0.0
        %592 = vmatpush1.msra.mxu0 0.0
        %593 = vmatprep.subr.mxu0 0.0
        %594 = vmatpush1.msra.mxu0 0.0
        %595 = vmatprep.subr.mxu0 0.0
        %596 = vmatpush1.msra.mxu0 0.0
        %597 = vmatprep.subr.mxu0 0.0
        %598 = vmatpush1.msra.mxu0 0.0
        %599 = vmatprep.subr.mxu0 0.0
        %600 = vmatpush1.msra.mxu0 0.0
        %601 = vmatprep.subr.mxu0 0.0
        %602 = vmatpush1.msra.mxu0 0.0
        %603 = vmatprep.subr.mxu0 0.0
        %604 = vmatpush1.msra.mxu0 0.0
        %605 = vmatprep.subr.mxu0 0.0
        %606 = vmatpush1.msra.mxu0 0.0
        %607 = vmatprep.subr.mxu0 0.0
        %608 = vmatpush1.msra.mxu0 0.0
        %609 = vmatprep.subr.mxu0 0.0
        %610 = vmatpush1.msra.mxu0 0.0
        %611 = vmatprep.subr.mxu0 0.0
        %612 = vmatpush1.msra.mxu0 0.0
        %613 = vmatprep.subr.mxu0 0.0
        %614 = vmatpush1.msra.mxu0 0.0
        %615 = vmatprep.subr.mxu0 0.0
        %616 = vmatpush1.msra.mxu0 0.0
        %617 = vmatprep.subr.mxu0 0.0
        %618 = vmatpush1.msra.mxu0 0.0
        %619 = vmatprep.subr.mxu0 0.0
        %620 = vmatpush1.msra.mxu0 0.0
        %621 = vmatprep.subr.mxu0 0.0
        %622 = vmatpush1.msra.mxu0 0.0
        %623 = vmatprep.subr.mxu0 0.0
        %624 = vmatpush1.msra.mxu0 0.0
        %625 = vmatprep.subr.mxu0 0.0
        %626 = vmatpush1.msra.mxu0 0.0
        %627 = vmatprep.subr.mxu0 0.0
        %628 = vmatpush1.msra.mxu0 0.0
        %629 = vmatprep.subr.mxu0 0.0
        %630 = vmatpush1.msra.mxu0 0.0
        %631 = vmatprep.subr.mxu0 0.0
        %632 = vmatpush1.msra.mxu0 0.0
        %633 = vmatprep.subr.mxu0 0.0
        %634 = vmatpush1.msra.mxu0 0.0
        %635 = vmatprep.subr.mxu0 0.0
        %636 = vmatpush1.msra.mxu0 0.0
        %637 = vmatprep.subr.mxu0 0.0
        %638 = vmatpush1.msra.mxu0 0.0
        %639 = vmatprep.subr.mxu0 0.0
        %640 = vmatpush1.msra.mxu0 0.0
        %641 = vmatprep.subr.mxu0 0.0
        %642 = vmatpush1.msra.mxu0 0.0
        %643 = vmatprep.subr.mxu0 0.0
        %644 = vmatpush1.msra.mxu0 0.0
        %645 = vmatprep.mubr.f32.mxu0 0.0
        %646 = vmatmul.mubr.f32.gmra.mrb[0].mxu0 %v426
        %v647 = vpop.f32.mrb[0].mxu0
        %v648 = vadd.f32 0.0, %v647
        %v649 = vpop.f32.mrb[0].mxu0
        %650 = vmatprep.mubr.f32.mxu0 0.0
        %651 = vmatmul.mubr.f32.gmra.mrb[0].mxu0 %v429
        %v652 = vpop.f32.mrb[0].mxu0
        %v653 = vadd.f32 0.0, %v652
        %v654 = vpop.f32.mrb[0].mxu0
        %655 = vdwg.mxu0
        %s656 = scalar_lea.vmem %s289, 16 [#allocation2]
        %v657 = vld [vmem:[%s656] sm:$0xff]
        %v659 = vsel %vm351, %v657, 0
        %661 = vmatprep.subr.mxu0 0.0
        %662 = vmatpush1.msra.mxu0 %v347
        %663 = vmatprep.subr.mxu0 0.0
        %664 = vmatpush1.msra.mxu0 0.0
        %665 = vmatprep.subr.mxu0 0.0
        %666 = vmatpush1.msra.mxu0 0.0
        %667 = vmatprep.subr.mxu0 0.0
        %668 = vmatpush1.msra.mxu0 0.0
        %669 = vmatprep.subr.mxu0 0.0
        %670 = vmatpush1.msra.mxu0 0.0
        %671 = vmatprep.subr.mxu0 0.0
        %672 = vmatpush1.msra.mxu0 0.0
        %673 = vmatprep.subr.mxu0 0.0
        %674 = vmatpush1.msra.mxu0 0.0
        %675 = vmatprep.subr.mxu0 0.0
        %676 = vmatpush1.msra.mxu0 0.0
        %677 = vmatprep.subr.mxu0 0.0
        %678 = vmatpush1.msra.mxu0 0.0
        %679 = vmatprep.subr.mxu0 0.0
        %680 = vmatpush1.msra.mxu0 0.0
        %681 = vmatprep.subr.mxu0 0.0
        %682 = vmatpush1.msra.mxu0 0.0
        %683 = vmatprep.subr.mxu0 0.0
        %684 = vmatpush1.msra.mxu0 0.0
        %685 = vmatprep.subr.mxu0 0.0
        %686 = vmatpush1.msra.mxu0 0.0
        %687 = vmatprep.subr.mxu0 0.0
        %688 = vmatpush1.msra.mxu0 0.0
        %689 = vmatprep.subr.mxu0 0.0
        %690 = vmatpush1.msra.mxu0 0.0
        %691 = vmatprep.subr.mxu0 0.0
        %692 = vmatpush1.msra.mxu0 0.0
        %693 = vmatprep.subr.mxu0 0.0
        %694 = vmatpush1.msra.mxu0 0.0
        %695 = vmatprep.subr.mxu0 0.0
        %696 = vmatpush1.msra.mxu0 0.0
        %697 = vmatprep.subr.mxu0 0.0
        %698 = vmatpush1.msra.mxu0 0.0
        %699 = vmatprep.subr.mxu0 0.0
        %700 = vmatpush1.msra.mxu0 0.0
        %701 = vmatprep.subr.mxu0 0.0
        %702 = vmatpush1.msra.mxu0 0.0
        %703 = vmatprep.subr.mxu0 0.0
        %704 = vmatpush1.msra.mxu0 0.0
        %705 = vmatprep.subr.mxu0 0.0
        %706 = vmatpush1.msra.mxu0 0.0
        %707 = vmatprep.subr.mxu0 0.0
        %708 = vmatpush1.msra.mxu0 0.0
        %709 = vmatprep.subr.mxu0 0.0
        %710 = vmatpush1.msra.mxu0 0.0
        %711 = vmatprep.subr.mxu0 0.0
        %712 = vmatpush1.msra.mxu0 0.0
        %713 = vmatprep.subr.mxu0 0.0
        %714 = vmatpush1.msra.mxu0 0.0
        %715 = vmatprep.subr.mxu0 0.0
        %716 = vmatpush1.msra.mxu0 0.0
        %717 = vmatprep.subr.mxu0 0.0
        %718 = vmatpush1.msra.mxu0 0.0
        %719 = vmatprep.subr.mxu0 0.0
        %720 = vmatpush1.msra.mxu0 0.0
        %721 = vmatprep.subr.mxu0 0.0
        %722 = vmatpush1.msra.mxu0 0.0
        %723 = vmatprep.subr.mxu0 0.0
        %724 = vmatpush1.msra.mxu0 0.0
        %725 = vmatprep.mubr.f32.mxu0 0.0
        %726 = vmatmul.mubr.f32.gmra.mrb[0].mxu0 %v659
        %v727 = vpop.f32.mrb[0].mxu0
        %v728 = vadd.f32 0.0, %v727
        %v729 = vpop.f32.mrb[0].mxu0
        %730 = vdwg.mxu0
        %731 = vmatprep.subr.mxu0 0.0
        %732 = vmatpush1.msra.mxu0 %v728
        %733 = vmatprep.subr.mxu0 0.0
        %734 = vmatpush1.msra.mxu0 0.0
        %735 = vmatprep.subr.mxu0 0.0
        %736 = vmatpush1.msra.mxu0 0.0
        %737 = vmatprep.subr.mxu0 0.0
        %738 = vmatpush1.msra.mxu0 0.0
        %739 = vmatprep.subr.mxu0 0.0
        %740 = vmatpush1.msra.mxu0 0.0
        %741 = vmatprep.subr.mxu0 0.0
        %742 = vmatpush1.msra.mxu0 0.0
        %743 = vmatprep.subr.mxu0 0.0
        %744 = vmatpush1.msra.mxu0 0.0
        %745 = vmatprep.subr.mxu0 0.0
        %746 = vmatpush1.msra.mxu0 0.0
        %747 = vmatprep.subr.mxu0 0.0
        %748 = vmatpush1.msra.mxu0 0.0
        %749 = vmatprep.subr.mxu0 0.0
        %750 = vmatpush1.msra.mxu0 0.0
        %751 = vmatprep.subr.mxu0 0.0
        %752 = vmatpush1.msra.mxu0 0.0
        %753 = vmatprep.subr.mxu0 0.0
        %754 = vmatpush1.msra.mxu0 0.0
        %755 = vmatprep.subr.mxu0 0.0
        %756 = vmatpush1.msra.mxu0 0.0
        %757 = vmatprep.subr.mxu0 0.0
        %758 = vmatpush1.msra.mxu0 0.0
        %759 = vmatprep.subr.mxu0 0.0
        %760 = vmatpush1.msra.mxu0 0.0
        %761 = vmatprep.subr.mxu0 0.0
        %762 = vmatpush1.msra.mxu0 0.0
        %763 = vmatprep.subr.mxu0 0.0
        %764 = vmatpush1.msra.mxu0 0.0
        %765 = vmatprep.subr.mxu0 0.0
        %766 = vmatpush1.msra.mxu0 0.0
        %767 = vmatprep.subr.mxu0 0.0
        %768 = vmatpush1.msra.mxu0 0.0
        %769 = vmatprep.subr.mxu0 0.0
        %770 = vmatpush1.msra.mxu0 0.0
        %771 = vmatprep.subr.mxu0 0.0
        %772 = vmatpush1.msra.mxu0 0.0
        %773 = vmatprep.subr.mxu0 0.0
        %774 = vmatpush1.msra.mxu0 0.0
        %775 = vmatprep.subr.mxu0 0.0
        %776 = vmatpush1.msra.mxu0 0.0
        %777 = vmatprep.subr.mxu0 0.0
        %778 = vmatpush1.msra.mxu0 0.0
        %779 = vmatprep.subr.mxu0 0.0
        %780 = vmatpush1.msra.mxu0 0.0
        %781 = vmatprep.subr.mxu0 0.0
        %782 = vmatpush1.msra.mxu0 0.0
        %783 = vmatprep.subr.mxu0 0.0
        %784 = vmatpush1.msra.mxu0 0.0
        %785 = vmatprep.subr.mxu0 0.0
        %786 = vmatpush1.msra.mxu0 0.0
        %787 = vmatprep.subr.mxu0 0.0
        %788 = vmatpush1.msra.mxu0 0.0
        %789 = vmatprep.subr.mxu0 0.0
        %790 = vmatpush1.msra.mxu0 0.0
        %791 = vmatprep.subr.mxu0 0.0
        %792 = vmatpush1.msra.mxu0 0.0
        %793 = vmatprep.subr.mxu0 0.0
        %794 = vmatpush1.msra.mxu0 0.0
        %795 = vmatprep.mubr.f32.mxu0 0.0
        %796 = vmatmul.mubr.f32.gmra.mrb[0].mxu0 %v426
        %v797 = vpop.f32.mrb[0].mxu0
        %v798 = vadd.f32 0.0, %v797
        %v799 = vpop.f32.mrb[0].mxu0
        %800 = vmatprep.mubr.f32.mxu0 0.0
        %801 = vmatmul.mubr.f32.gmra.mrb[0].mxu0 %v429
        %v802 = vpop.f32.mrb[0].mxu0
        %v803 = vadd.f32 0.0, %v802
        %v804 = vpop.f32.mrb[0].mxu0
        %805 = vdwg.mxu0
        %s806 = scalar_lea.vmem %s289, 24 [#allocation2]
        %v807 = vld [vmem:[%s806] sm:$0xff]
        %v809 = vsel %vm351, %v807, 0
        %811 = vmatprep.subr.mxu0 0.0
        %812 = vmatpush1.msra.mxu0 %v347
        %813 = vmatprep.subr.mxu0 0.0
        %814 = vmatpush1.msra.mxu0 0.0
        %815 = vmatprep.subr.mxu0 0.0
        %816 = vmatpush1.msra.mxu0 0.0
        %817 = vmatprep.subr.mxu0 0.0
        %818 = vmatpush1.msra.mxu0 0.0
        %819 = vmatprep.subr.mxu0 0.0
        %820 = vmatpush1.msra.mxu0 0.0
        %821 = vmatprep.subr.mxu0 0.0
        %822 = vmatpush1.msra.mxu0 0.0
        %823 = vmatprep.subr.mxu0 0.0
        %824 = vmatpush1.msra.mxu0 0.0
        %825 = vmatprep.subr.mxu0 0.0
        %826 = vmatpush1.msra.mxu0 0.0
        %827 = vmatprep.subr.mxu0 0.0
        %828 = vmatpush1.msra.mxu0 0.0
        %829 = vmatprep.subr.mxu0 0.0
        %830 = vmatpush1.msra.mxu0 0.0
        %831 = vmatprep.subr.mxu0 0.0
        %832 = vmatpush1.msra.mxu0 0.0
        %833 = vmatprep.subr.mxu0 0.0
        %834 = vmatpush1.msra.mxu0 0.0
        %835 = vmatprep.subr.mxu0 0.0
        %836 = vmatpush1.msra.mxu0 0.0
        %837 = vmatprep.subr.mxu0 0.0
        %838 = vmatpush1.msra.mxu0 0.0
        %839 = vmatprep.subr.mxu0 0.0
        %840 = vmatpush1.msra.mxu0 0.0
        %841 = vmatprep.subr.mxu0 0.0
        %842 = vmatpush1.msra.mxu0 0.0
        %843 = vmatprep.subr.mxu0 0.0
        %844 = vmatpush1.msra.mxu0 0.0
        %845 = vmatprep.subr.mxu0 0.0
        %846 = vmatpush1.msra.mxu0 0.0
        %847 = vmatprep.subr.mxu0 0.0
        %848 = vmatpush1.msra.mxu0 0.0
        %849 = vmatprep.subr.mxu0 0.0
        %850 = vmatpush1.msra.mxu0 0.0
        %851 = vmatprep.subr.mxu0 0.0
        %852 = vmatpush1.msra.mxu0 0.0
        %853 = vmatprep.subr.mxu0 0.0
        %854 = vmatpush1.msra.mxu0 0.0
        %855 = vmatprep.subr.mxu0 0.0
        %856 = vmatpush1.msra.mxu0 0.0
        %857 = vmatprep.subr.mxu0 0.0
        %858 = vmatpush1.msra.mxu0 0.0
        %859 = vmatprep.subr.mxu0 0.0
        %860 = vmatpush1.msra.mxu0 0.0
        %861 = vmatprep.subr.mxu0 0.0
        %862 = vmatpush1.msra.mxu0 0.0
        %863 = vmatprep.subr.mxu0 0.0
        %864 = vmatpush1.msra.mxu0 0.0
        %865 = vmatprep.subr.mxu0 0.0
        %866 = vmatpush1.msra.mxu0 0.0
        %867 = vmatprep.subr.mxu0 0.0
        %868 = vmatpush1.msra.mxu0 0.0
        %869 = vmatprep.subr.mxu0 0.0
        %870 = vmatpush1.msra.mxu0 0.0
        %871 = vmatprep.subr.mxu0 0.0
        %872 = vmatpush1.msra.mxu0 0.0
        %873 = vmatprep.subr.mxu0 0.0
        %874 = vmatpush1.msra.mxu0 0.0
        %875 = vmatprep.mubr.f32.mxu0 0.0
        %876 = vmatmul.mubr.f32.gmra.mrb[0].mxu0 %v809
        %v877 = vpop.f32.mrb[0].mxu0
        %v878 = vadd.f32 0.0, %v877
        %v879 = vpop.f32.mrb[0].mxu0
        %880 = vdwg.mxu0
        %881 = vmatprep.subr.mxu0 0.0
        %882 = vmatpush1.msra.mxu0 %v878
        %883 = vmatprep.subr.mxu0 0.0
        %884 = vmatpush1.msra.mxu0 0.0
        %885 = vmatprep.subr.mxu0 0.0
        %886 = vmatpush1.msra.mxu0 0.0
        %887 = vmatprep.subr.mxu0 0.0
        %888 = vmatpush1.msra.mxu0 0.0
        %889 = vmatprep.subr.mxu0 0.0
        %890 = vmatpush1.msra.mxu0 0.0
        %891 = vmatprep.subr.mxu0 0.0
        %892 = vmatpush1.msra.mxu0 0.0
        %893 = vmatprep.subr.mxu0 0.0
        %894 = vmatpush1.msra.mxu0 0.0
        %895 = vmatprep.subr.mxu0 0.0
        %896 = vmatpush1.msra.mxu0 0.0
        %897 = vmatprep.subr.mxu0 0.0
        %898 = vmatpush1.msra.mxu0 0.0
        %899 = vmatprep.subr.mxu0 0.0
        %900 = vmatpush1.msra.mxu0 0.0
        %901 = vmatprep.subr.mxu0 0.0
        %902 = vmatpush1.msra.mxu0 0.0
        %903 = vmatprep.subr.mxu0 0.0
        %904 = vmatpush1.msra.mxu0 0.0
        %905 = vmatprep.subr.mxu0 0.0
        %906 = vmatpush1.msra.mxu0 0.0
        %907 = vmatprep.subr.mxu0 0.0
        %908 = vmatpush1.msra.mxu0 0.0
        %909 = vmatprep.subr.mxu0 0.0
        %910 = vmatpush1.msra.mxu0 0.0
        %911 = vmatprep.subr.mxu0 0.0
        %912 = vmatpush1.msra.mxu0 0.0
        %913 = vmatprep.subr.mxu0 0.0
        %914 = vmatpush1.msra.mxu0 0.0
        %915 = vmatprep.subr.mxu0 0.0
        %916 = vmatpush1.msra.mxu0 0.0
        %917 = vmatprep.subr.mxu0 0.0
        %918 = vmatpush1.msra.mxu0 0.0
        %919 = vmatprep.subr.mxu0 0.0
        %920 = vmatpush1.msra.mxu0 0.0
        %921 = vmatprep.subr.mxu0 0.0
        %922 = vmatpush1.msra.mxu0 0.0
        %923 = vmatprep.subr.mxu0 0.0
        %924 = vmatpush1.msra.mxu0 0.0
        %925 = vmatprep.subr.mxu0 0.0
        %926 = vmatpush1.msra.mxu0 0.0
        %927 = vmatprep.subr.mxu0 0.0
        %928 = vmatpush1.msra.mxu0 0.0
        %929 = vmatprep.subr.mxu0 0.0
        %930 = vmatpush1.msra.mxu0 0.0
        %931 = vmatprep.subr.mxu0 0.0
        %932 = vmatpush1.msra.mxu0 0.0
        %933 = vmatprep.subr.mxu0 0.0
        %934 = vmatpush1.msra.mxu0 0.0
        %935 = vmatprep.subr.mxu0 0.0
        %936 = vmatpush1.msra.mxu0 0.0
        %937 = vmatprep.subr.mxu0 0.0
        %938 = vmatpush1.msra.mxu0 0.0
        %939 = vmatprep.subr.mxu0 0.0
        %940 = vmatpush1.msra.mxu0 0.0
        %941 = vmatprep.subr.mxu0 0.0
        %942 = vmatpush1.msra.mxu0 0.0
        %943 = vmatprep.subr.mxu0 0.0
        %944 = vmatpush1.msra.mxu0 0.0
        %945 = vmatprep.mubr.f32.mxu0 0.0
        %946 = vmatmul.mubr.f32.gmra.mrb[0].mxu0 %v426
        %v947 = vpop.f32.mrb[0].mxu0
        %v948 = vadd.f32 0.0, %v947
        %v949 = vpop.f32.mrb[0].mxu0
        %950 = vmatprep.mubr.f32.mxu0 0.0
        %951 = vmatmul.mubr.f32.gmra.mrb[0].mxu0 %v429
        %v952 = vpop.f32.mrb[0].mxu0
        %v953 = vadd.f32 0.0, %v952
        %v954 = vpop.f32.mrb[0].mxu0
        %955 = vdwg.mxu0
        %v956 = vmax.f32 %v498, %v648
        %v957 = vmax.f32 %v503, %v653
        %v958 = vmax.f32 %v956, %v798
        %v959 = vmax.f32 %v957, %v803
        %v960 = vmax.f32 %v958, %v948
        %v961 = vmax.f32 %v959, %v953
        %v962 = vsub.f32 %v498, %v960
        %v963 = vsub.f32 %v503, %v961
        %v964 = vmul.f32 %v962, 1.442695
        %v965 = vpow.pop %v964
        %v966 = vmul.f32 %v963, 1.442695
        %v967 = vpow.pop %v966
        %v968 = vadd.f32 %v965, 0.0
        %v969 = vadd.f32 %v967, 0.0
        %v970 = vsub.f32 %v648, %v960
        %v971 = vsub.f32 %v653, %v961
        %v972 = vmul.f32 %v970, 1.442695
        %v973 = vpow.pop %v972
        %v974 = vmul.f32 %v971, 1.442695
        %v975 = vpow.pop %v974
        %v976 = vadd.f32 %v968, %v973
        %v977 = vadd.f32 %v969, %v975
        %v978 = vsub.f32 %v798, %v960
        %v979 = vsub.f32 %v803, %v961
        %v980 = vmul.f32 %v978, 1.442695
        %v981 = vpow.pop %v980
        %v982 = vmul.f32 %v979, 1.442695
        %v983 = vpow.pop %v982
        %v984 = vadd.f32 %v976, %v981
        %v985 = vadd.f32 %v977, %v983
        %v986 = vsub.f32 %v948, %v960
        %v987 = vsub.f32 %v953, %v961
        %v988 = vmul.f32 %v986, 1.442695
        %v989 = vpow.pop %v988
        %v990 = vmul.f32 %v987, 1.442695
        %v991 = vpow.pop %v990
        %v992 = vadd.f32 %v984, %v989
        %v993 = vadd.f32 %v985, %v991
        %v994 = vrcp.pop %v992
        %v995 = vmul.f32 1.0, %v994
        %v996 = vrcp.pop %v993
        %v997 = vmul.f32 1.0, %v996
        %vm998 = vcmp.ne.s32.totalorder %v348, 255
        %vm999 = vcmp.ne.s32.totalorder %v349, 255
        %v1000 = vsel %vm998, 1, 0
        %v1001 = vsel %vm999, 1, 0
        %v1002 = vcvt.s32.f32 %v1000
        %v1003 = vcvt.s32.f32 %v1001
        %v1004 = vmul.f32 %v965, %v995
        %v1005 = vmul.f32 %v967, %v997
        %vm1006 = vcmp.eq.s32.totalorder %v348, 0
        %vm1007 = vcmp.eq.s32.totalorder %v349, 0
        %v1008 = vsel %vm1006, 1, 0
        %v1009 = vsel %vm1007, 1, 0
        %v1010 = vcvt.s32.f32 %v1008
        %v1011 = vcvt.s32.f32 %v1009
        %v1012 = vsub.f32 %v1010, %v1004
        %v1013 = vsub.f32 %v1011, %v1005
        %v1014 = vand.u32 2147483647, %v1012
        %v1015 = vand.u32 2147483647, %v1013
        %v1016 = vmul.f32 %v1014, %v1002
        %v1017 = vmul.f32 %v1015, %v1003
        %v1018 = vsub.f32 0.0, %v1016
        %v1019 = vsub.f32 0.0, %v1017
        %vm1020 = vcmask 130048
        %1021 = vst.msk [vmem:[%s334] sm:$0xff] %vm1020, %v1018
        %1022 = vst.msk [vmem:[%s334 + $0x8] sm:$0xff] %vm1020, %v1019
        %v1023 = vmul.f32 %v1010, 2.0
        %v1024 = vmul.f32 %v1011, 2.0
        %v1025 = vadd.f32 %v1023, %v1002
        %v1026 = vadd.f32 %v1024, %v1003
        %v1027 = vpack.c.bf16 %v1026, %v1025
        %v1029 = vunpack.c.l.b16 %v1027
        %v1030 = vunpack.c.h.b16 %v1027
        %v1031 = vpack.c.b16 %v1029, %v1029
        %v1032 = vpack.c.b16 %v1030, %v1030
        %vm1035 = vcmask 125952
        %1036 = vst.msk [vmem:[%s340] sm:$0xf] %vm1035, %v1031
        %1037 = vst.msk [vmem:[%s340 + $0x4] sm:$0xf] %vm1035, %v1032
        %v1038 = vmul.f32 %v973, %v995
        %v1039 = vmul.f32 %v975, %v997
        %vm1040 = vcmp.eq.s32.totalorder %v348, 1
        %vm1041 = vcmp.eq.s32.totalorder %v349, 1
        %v1042 = vsel %vm1040, 1, 0
        %v1043 = vsel %vm1041, 1, 0
        %v1044 = vcvt.s32.f32 %v1042
        %v1045 = vcvt.s32.f32 %v1043
        %v1046 = vsub.f32 %v1044, %v1038
        %v1047 = vsub.f32 %v1045, %v1039
        %v1048 = vand.u32 2147483647, %v1046
        %v1049 = vand.u32 2147483647, %v1047
        %v1050 = vmul.f32 %v1048, %v1002
        %v1051 = vmul.f32 %v1049, %v1003
        %v1052 = vsub.f32 0.0, %v1050
        %v1053 = vsub.f32 0.0, %v1051
        %s1054 = scalar_lea.vmem %s334, 16 [#allocation9]
        %1055 = vst.msk [vmem:[%s1054] sm:$0xff] %vm1020, %v1052
        %1056 = vst.msk [vmem:[%s1054 + $0x8] sm:$0xff] %vm1020, %v1053
        %v1057 = vmul.f32 %v1044, 2.0
        %v1058 = vmul.f32 %v1045, 2.0
        %v1059 = vadd.f32 %v1057, %v1002
        %v1060 = vadd.f32 %v1058, %v1003
        %v1061 = vpack.c.bf16 %v1060, %v1059
        %v1063 = vunpack.c.l.b16 %v1061
        %v1064 = vunpack.c.h.b16 %v1061
        %v1065 = vpack.c.b16 %v1063, %v1063
        %v1066 = vpack.c.b16 %v1064, %v1064
        %s1069 = scalar_lea.vmem %s340, 8 [#allocation10]
        %1070 = vst.msk [vmem:[%s1069] sm:$0xf] %vm1035, %v1065
        %1071 = vst.msk [vmem:[%s1069 + $0x4] sm:$0xf] %vm1035, %v1066
        %v1072 = vmul.f32 %v981, %v995
        %v1073 = vmul.f32 %v983, %v997
        %vm1074 = vcmp.eq.s32.totalorder %v348, 2
        %vm1075 = vcmp.eq.s32.totalorder %v349, 2
        %v1076 = vsel %vm1074, 1, 0
        %v1077 = vsel %vm1075, 1, 0
        %v1078 = vcvt.s32.f32 %v1076
        %v1079 = vcvt.s32.f32 %v1077
        %v1080 = vsub.f32 %v1078, %v1072
        %v1081 = vsub.f32 %v1079, %v1073
        %v1082 = vand.u32 2147483647, %v1080
        %v1083 = vand.u32 2147483647, %v1081
        %v1084 = vmul.f32 %v1082, %v1002
        %v1085 = vmul.f32 %v1083, %v1003
        %v1086 = vsub.f32 0.0, %v1084
        %v1087 = vsub.f32 0.0, %v1085
        %s1088 = scalar_lea.vmem %s334, 32 [#allocation9]
        %1089 = vst.msk [vmem:[%s1088] sm:$0xff] %vm1020, %v1086
        %1090 = vst.msk [vmem:[%s1088 + $0x8] sm:$0xff] %vm1020, %v1087
        %v1091 = vmul.f32 %v1078, 2.0
        %v1092 = vmul.f32 %v1079, 2.0
        %v1093 = vadd.f32 %v1091, %v1002
        %v1094 = vadd.f32 %v1092, %v1003
        %v1095 = vpack.c.bf16 %v1094, %v1093
        %v1097 = vunpack.c.l.b16 %v1095
        %v1098 = vunpack.c.h.b16 %v1095
        %v1099 = vpack.c.b16 %v1097, %v1097
        %v1100 = vpack.c.b16 %v1098, %v1098
        %s1103 = scalar_lea.vmem %s340, 16 [#allocation10]
        %1104 = vst.msk [vmem:[%s1103] sm:$0xf] %vm1035, %v1099
        %1105 = vst.msk [vmem:[%s1103 + $0x4] sm:$0xf] %vm1035, %v1100
        %v1106 = vmul.f32 %v989, %v995
        %v1107 = vmul.f32 %v991, %v997
        %vm1108 = vcmp.eq.s32.totalorder %v348, 3
        %vm1109 = vcmp.eq.s32.totalorder %v349, 3
        %v1110 = vsel %vm1108, 1, 0
        %v1111 = vsel %vm1109, 1, 0
        %v1112 = vcvt.s32.f32 %v1110
        %v1113 = vcvt.s32.f32 %v1111
        %v1114 = vsub.f32 %v1112, %v1106
        %v1115 = vsub.f32 %v1113, %v1107
        %v1116 = vand.u32 2147483647, %v1114
        %v1117 = vand.u32 2147483647, %v1115
        %v1118 = vmul.f32 %v1116, %v1002
        %v1119 = vmul.f32 %v1117, %v1003
        %v1120 = vsub.f32 0.0, %v1118
        %v1121 = vsub.f32 0.0, %v1119
        %s1122 = scalar_lea.vmem %s334, 48 [#allocation9]
        %1123 = vst.msk [vmem:[%s1122] sm:$0xff] %vm1020, %v1120
        %1124 = vst.msk [vmem:[%s1122 + $0x8] sm:$0xff] %vm1020, %v1121
        %v1125 = vmul.f32 %v1112, 2.0
        %v1126 = vmul.f32 %v1113, 2.0
        %v1127 = vadd.f32 %v1125, %v1002
        %v1128 = vadd.f32 %v1126, %v1003
        %v1129 = vpack.c.bf16 %v1128, %v1127
        %v1131 = vunpack.c.l.b16 %v1129
        %v1132 = vunpack.c.h.b16 %v1129
        %v1133 = vpack.c.b16 %v1131, %v1131
        %v1134 = vpack.c.b16 %v1132, %v1132
        %s1137 = scalar_lea.vmem %s340, 24 [#allocation10]
        %1138 = vst.msk [vmem:[%s1137] sm:$0xf] %vm1035, %v1133
        %1139 = vst.msk [vmem:[%s1137 + $0x4] sm:$0xf] %vm1035, %v1134
        %s1140 = sand.u32 %s147, 1
        %s1141 = sand.u32 %s147, 1
        %s1142 = smul.addr %s1141, 64
        %s1143 = scalar_lea.vmem [#allocation9], %s1142
        %s1144 = sand.u32 %s175, 1
        %s1145 = sand.u32 %s175, 1
        %s1146 = smul.addr %s1145, 32
        %s1147 = scalar_lea.vmem [#allocation10], %s1146
        // Predicated region
        $region53: #{_lambda_.2} parent=35 // pred_check
          %p1148 = pneg %p157
        $region54: #{_lambda_.2} parent=35 // pred_check_branch
          %1150 = sbr.rel (%p1148) target = $region56
        $region55: #{_lambda_.2} parent=35 // pred_region
          %s1151 = smul.u32 2, %s29
          %s1152 = smul.addr %s28, 2
          %s1153 = sadd.s32 %s1151, %s1152
          %s1154 = smul.addr %s1153, 8
          %s1155 = scalar_lea.vmem %s4, %s1154
          // Predicated region
          $region57: #{_lambda_.2} parent=55 // pred_check
            _
          $region58: #{_lambda_.2} parent=55 // pred_check_branch
            %1157 = sbr.rel (0) target = $region60
          $region59: #{_lambda_.2} parent=55 // pred_region
            // Predicated region
            $region61: #{_lambda_.2} parent=59 // pred_check
              _
            $region62: #{_lambda_.2} parent=59 // pred_check_branch
              %1159 = sbr.rel (0) target = $region64
            $region63: #{_lambda_.2} parent=59 // pred_region
              // Predicated region
              $region76: #{_lambda_.2} parent=63 // pred_check
                _
              $region77: #{_lambda_.2} parent=63 // pred_check_branch
                %1188 = sbr.rel (0) target = $region79
              $region78: #{_lambda_.2} parent=63 // pred_region
                loop: start=0, step=1, limit=1
                $region80: #{_lambda_.2} parent=78 // loop_pre_header
                  _
                $region81: #{_lambda_.2} parent=78 // loop_header
                  %s1190 = sphi 0, %s1194
                  %p1191 = scmp.ge.s32.totalorder %s1190, 1
                  %s1195 = sphi %s1143, %s1143
                  %s1196 = sphi %s1155, %s1155
                $region82: #{_lambda_.2} parent=78 // loop_header_branch
                  %1193 = sbr.rel (%p1191) target = $region86
                $region83: #{_lambda_.2} parent=78 // loop_body
                  %v1197 = vld [vmem:[%s1195] sm:$0xff]
                  %1198 = vst [vmem:[%s1196] sm:$0xff] %v1197
                  %v1199 = vld [vmem:[%s1195 + $0x8] sm:$0xff]
                  %1200 = vst [vmem:[%s1196 + $0x8] sm:$0xff] %v1199
                  %v1201 = vld [vmem:[%s1195 + $0x10] sm:$0xff]
                  %1202 = vst [vmem:[%s1196 + $0x20] sm:$0xff] %v1201
                  %v1203 = vld [vmem:[%s1195 + $0x18] sm:$0xff]
                  %1204 = vst [vmem:[%s1196 + $0x28] sm:$0xff] %v1203
                  %v1205 = vld [vmem:[%s1195 + $0x20] sm:$0xff]
                  %1206 = vst [vmem:[%s1196 + $0x40] sm:$0xff] %v1205
                  %v1207 = vld [vmem:[%s1195 + $0x28] sm:$0xff]
                  %1208 = vst [vmem:[%s1196 + $0x48] sm:$0xff] %v1207
                  %v1209 = vld [vmem:[%s1195 + $0x30] sm:$0xff]
                  %1210 = vst [vmem:[%s1196 + $0x60] sm:$0xff] %v1209
                  %v1211 = vld [vmem:[%s1195 + $0x38] sm:$0xff]
                  %1212 = vst [vmem:[%s1196 + $0x68] sm:$0xff] %v1211
                $region84: #{_lambda_.2} parent=78 // loop_footer
                  %s1194 = sadd.s32 1, %s1190
                $region85: #{_lambda_.2} parent=78 // loop_footer_branch
                  %1189 = sbr.rel target = $region81
                $region86: #{_lambda_.2} parent=78 // loop_exit
                  _
              $region79: #{_lambda_.2} parent=63 // pred_fallthru
                _
              // Predicated region
              $region87: #{_lambda_.2} parent=63 // pred_check
                _
              $region88: #{_lambda_.2} parent=63 // pred_check_branch
                %1214 = sbr.rel target = $region90
              $region89: #{_lambda_.2} parent=63 // pred_region
                _
              $region90: #{_lambda_.2} parent=63 // pred_fallthru
                _
            $region64: #{_lambda_.2} parent=59 // pred_fallthru
              _
            // Predicated region
            $region65: #{_lambda_.2} parent=59 // pred_check
              _
            $region66: #{_lambda_.2} parent=59 // pred_check_branch
              %1161 = sbr.rel target = $region68
            $region67: #{_lambda_.2} parent=59 // pred_region
              loop: start=0, step=1, limit=1
              $region69: #{_lambda_.2} parent=67 // loop_pre_header
                _
              $region70: #{_lambda_.2} parent=67 // loop_header
                %s1164 = sphi 0, %s1168
                %p1165 = scmp.ge.s32.totalorder %s1164, 1
                %s1169 = sphi %s1143, %s1143
                %s1170 = sphi %s1155, %s1155
              $region71: #{_lambda_.2} parent=67 // loop_header_branch
                %1167 = sbr.rel (%p1165) target = $region75
              $region72: #{_lambda_.2} parent=67 // loop_body
                %v1171 = vld [vmem:[%s1169] sm:$0xff]
                %1172 = vst [vmem:[%s1170] sm:$0xff] %v1171
                %v1173 = vld [vmem:[%s1169 + $0x8] sm:$0xff]
                %1174 = vst [vmem:[%s1170 + $0x8] sm:$0xff] %v1173
                %v1175 = vld [vmem:[%s1169 + $0x10] sm:$0xff]
                %1176 = vst [vmem:[%s1170 + $0x20] sm:$0xff] %v1175
                %v1177 = vld [vmem:[%s1169 + $0x18] sm:$0xff]
                %1178 = vst [vmem:[%s1170 + $0x28] sm:$0xff] %v1177
                %v1179 = vld [vmem:[%s1169 + $0x20] sm:$0xff]
                %1180 = vst [vmem:[%s1170 + $0x40] sm:$0xff] %v1179
                %v1181 = vld [vmem:[%s1169 + $0x28] sm:$0xff]
                %1182 = vst [vmem:[%s1170 + $0x48] sm:$0xff] %v1181
                %v1183 = vld [vmem:[%s1169 + $0x30] sm:$0xff]
                %1184 = vst [vmem:[%s1170 + $0x60] sm:$0xff] %v1183
                %v1185 = vld [vmem:[%s1169 + $0x38] sm:$0xff]
                %1186 = vst [vmem:[%s1170 + $0x68] sm:$0xff] %v1185
              $region73: #{_lambda_.2} parent=67 // loop_footer
                %s1168 = sadd.s32 1, %s1164
              $region74: #{_lambda_.2} parent=67 // loop_footer_branch
                %1163 = sbr.rel target = $region70
              $region75: #{_lambda_.2} parent=67 // loop_exit
                _
            $region68: #{_lambda_.2} parent=59 // pred_fallthru
              _
          $region60: #{_lambda_.2} parent=55 // pred_fallthru
            _
          %1215 = vnop
        $region56: #{_lambda_.2} parent=35 // pred_fallthru
          _
        // Predicated region
        $region91: #{_lambda_.2} parent=35 // pred_check
          %p1216 = pneg %p185
        $region92: #{_lambda_.2} parent=35 // pred_check_branch
          %1218 = sbr.rel (%p1216) target = $region94
        $region93: #{_lambda_.2} parent=35 // pred_region
          %s1219 = smul.u32 2, %s29
          %s1220 = smul.addr %s28, 2
          %s1221 = sadd.s32 %s1219, %s1220
          %s1222 = smul.addr %s1221, 4
          %s1223 = scalar_lea.vmem %s5, %s1222
          // Predicated region
          $region95: #{_lambda_.2} parent=93 // pred_check
            _
          $region96: #{_lambda_.2} parent=93 // pred_check_branch
            %1225 = sbr.rel (0) target = $region98
          $region97: #{_lambda_.2} parent=93 // pred_region
            // Predicated region
            $region99: #{_lambda_.2} parent=97 // pred_check
              _
            $region100: #{_lambda_.2} parent=97 // pred_check_branch
              %1227 = sbr.rel target = $region102
            $region101: #{_lambda_.2} parent=97 // pred_region
              // Predicated region
              $region114: #{_lambda_.2} parent=101 // pred_check
                _
              $region115: #{_lambda_.2} parent=101 // pred_check_branch
                %1256 = sbr.rel (0) target = $region117
              $region116: #{_lambda_.2} parent=101 // pred_region
                loop: start=0, step=1, limit=1
                $region118: #{_lambda_.2} parent=116 // loop_pre_header
                  _
                $region119: #{_lambda_.2} parent=116 // loop_header
                  %s1258 = sphi 0, %s1262
                  %p1259 = scmp.ge.s32.totalorder %s1258, 1
                  %s1263 = sphi %s1147, %s1147
                  %s1264 = sphi %s1223, %s1223
                $region120: #{_lambda_.2} parent=116 // loop_header_branch
                  %1261 = sbr.rel (%p1259) target = $region124
                $region121: #{_lambda_.2} parent=116 // loop_body
                  _
                $region122: #{_lambda_.2} parent=116 // loop_footer
                  %s1262 = sadd.s32 1, %s1258
                $region123: #{_lambda_.2} parent=116 // loop_footer_branch
                  %1257 = sbr.rel target = $region119
                $region124: #{_lambda_.2} parent=116 // loop_exit
                  _
                loop: start=0, step=1, limit=1
                $region125: #{_lambda_.2} parent=116 // loop_pre_header
                  _
                $region126: #{_lambda_.2} parent=116 // loop_header
                  %s1267 = sphi 0, %s1271
                  %p1268 = scmp.ge.s32.totalorder %s1267, 1
                  %s1272 = sphi %s1147, %s1147
                  %s1273 = sphi %s1223, %s1223
                $region127: #{_lambda_.2} parent=116 // loop_header_branch
                  %1270 = sbr.rel (%p1268) target = $region131
                $region128: #{_lambda_.2} parent=116 // loop_body
                  %v1274 = vld [vmem:[%s1272] sm:$0xf]
                  %1275 = vst [vmem:[%s1273] sm:$0xf] %v1274
                  %v1276 = vld [vmem:[%s1272 + $0x4] sm:$0xf]
                  %1277 = vst [vmem:[%s1273 + $0x4] sm:$0xf] %v1276
                  %v1278 = vld [vmem:[%s1272 + $0x8] sm:$0xf]
                  %1279 = vst [vmem:[%s1273 + $0x10] sm:$0xf] %v1278
                  %v1280 = vld [vmem:[%s1272 + $0xc] sm:$0xf]
                  %1281 = vst [vmem:[%s1273 + $0x14] sm:$0xf] %v1280
                  %v1282 = vld [vmem:[%s1272 + $0x10] sm:$0xf]
                  %1283 = vst [vmem:[%s1273 + $0x20] sm:$0xf] %v1282
                  %v1284 = vld [vmem:[%s1272 + $0x14] sm:$0xf]
                  %1285 = vst [vmem:[%s1273 + $0x24] sm:$0xf] %v1284
                  %v1286 = vld [vmem:[%s1272 + $0x18] sm:$0xf]
                  %1287 = vst [vmem:[%s1273 + $0x30] sm:$0xf] %v1286
                  %v1288 = vld [vmem:[%s1272 + $0x1c] sm:$0xf]
                  %1289 = vst [vmem:[%s1273 + $0x34] sm:$0xf] %v1288
                $region129: #{_lambda_.2} parent=116 // loop_footer
                  %s1271 = sadd.s32 1, %s1267
                $region130: #{_lambda_.2} parent=116 // loop_footer_branch
                  %1266 = sbr.rel target = $region126
                $region131: #{_lambda_.2} parent=116 // loop_exit
                  _
              $region117: #{_lambda_.2} parent=101 // pred_fallthru
                _
            $region102: #{_lambda_.2} parent=97 // pred_fallthru
              _
            // Predicated region
            $region103: #{_lambda_.2} parent=97 // pred_check
              _
            $region104: #{_lambda_.2} parent=97 // pred_check_branch
              %1229 = sbr.rel (0) target = $region106
            $region105: #{_lambda_.2} parent=97 // pred_region
              loop: start=0, step=1, limit=1
              $region107: #{_lambda_.2} parent=105 // loop_pre_header
                _
              $region108: #{_lambda_.2} parent=105 // loop_header
                %s1232 = sphi 0, %s1236
                %p1233 = scmp.ge.s32.totalorder %s1232, 1
                %s1237 = sphi %s1147, %s1147
                %s1238 = sphi %s1223, %s1223
              $region109: #{_lambda_.2} parent=105 // loop_header_branch
                %1235 = sbr.rel (%p1233) target = $region113
              $region110: #{_lambda_.2} parent=105 // loop_body
                %v1239 = vld [vmem:[%s1237] sm:$0xf]
                %1240 = vst [vmem:[%s1238] sm:$0xf] %v1239
                %v1241 = vld [vmem:[%s1237 + $0x4] sm:$0xf]
                %1242 = vst [vmem:[%s1238 + $0x4] sm:$0xf] %v1241
                %v1243 = vld [vmem:[%s1237 + $0x8] sm:$0xf]
                %1244 = vst [vmem:[%s1238 + $0x10] sm:$0xf] %v1243
                %v1245 = vld [vmem:[%s1237 + $0xc] sm:$0xf]
                %1246 = vst [vmem:[%s1238 + $0x14] sm:$0xf] %v1245
                %v1247 = vld [vmem:[%s1237 + $0x10] sm:$0xf]
                %1248 = vst [vmem:[%s1238 + $0x20] sm:$0xf] %v1247
                %v1249 = vld [vmem:[%s1237 + $0x14] sm:$0xf]
                %1250 = vst [vmem:[%s1238 + $0x24] sm:$0xf] %v1249
                %v1251 = vld [vmem:[%s1237 + $0x18] sm:$0xf]
                %1252 = vst [vmem:[%s1238 + $0x30] sm:$0xf] %v1251
                %v1253 = vld [vmem:[%s1237 + $0x1c] sm:$0xf]
                %1254 = vst [vmem:[%s1238 + $0x34] sm:$0xf] %v1253
              $region111: #{_lambda_.2} parent=105 // loop_footer
                %s1236 = sadd.s32 1, %s1232
              $region112: #{_lambda_.2} parent=105 // loop_footer_branch
                %1231 = sbr.rel target = $region108
              $region113: #{_lambda_.2} parent=105 // loop_exit
                _
            $region106: #{_lambda_.2} parent=97 // pred_fallthru
              _
          $region98: #{_lambda_.2} parent=93 // pred_fallthru
            _
          %1290 = vnop
        $region94: #{_lambda_.2} parent=35 // pred_fallthru
          _
      $region36: #{_lambda_.2} parent=5 // pred_fallthru
        _
      %p1291 = scmp.le.s32.totalorder 2, %s19
      // Predicated region
      $region132: #{_lambda_.2} parent=5 // pred_check
        %p1292 = pneg %p1291
      $region133: #{_lambda_.2} parent=5 // pred_check_branch
        %1294 = sbr.rel (%p1292) target = $region135
      $region134: #{_lambda_.2} parent=5 // pred_region
        %s1295 = ssub.s32 %s19, 2
        // Predicated region
        $region136: #{_lambda_.2} parent=134 // pred_check
          %p1296 = pneg %p163
        $region137: #{_lambda_.2} parent=134 // pred_check_branch
          %1298 = sbr.rel (%p1296) target = $region139
        $region138: #{_lambda_.2} parent=134 // pred_region
          %s1299 = sand.u32 %s148, 1
          %s1300 = sand.u32 %s148, 1
          %s1301 = smul.addr %s1300, 64
          %s1302 = scalar_lea.vmem [#allocation9], %s1301
        $region139: #{_lambda_.2} parent=134 // pred_fallthru
          _
        // Predicated region
        $region140: #{_lambda_.2} parent=134 // pred_check
          %p1303 = pneg %p191
        $region141: #{_lambda_.2} parent=134 // pred_check_branch
          %1305 = sbr.rel (%p1303) target = $region143
        $region142: #{_lambda_.2} parent=134 // pred_region
          %s1306 = sand.u32 %s176, 1
          %s1307 = sand.u32 %s176, 1
          %s1308 = smul.addr %s1307, 32
          %s1309 = scalar_lea.vmem [#allocation10], %s1308
        $region143: #{_lambda_.2} parent=134 // pred_fallthru
          _
      $region135: #{_lambda_.2} parent=5 // pred_fallthru
        _
    $region6: #{_lambda_.2} parent=1 // loop_footer
      %s23 = sadd.s32 1, %s19
    $region7: #{_lambda_.2} parent=1 // loop_footer_branch
      %18 = sbr.rel target = $region3
    $region8: #{_lambda_.2} parent=1 // loop_exit
      _
    %1310 = vsyncpa [#allocation3], 1
    %s1311 = scalar_lea.sflag [#allocation3], 1
    %1312 = vsyncpa %s1311, 1
    %1313 = vsyncpa [#allocation5], 1
    %1314 = vsyncpa [#allocation8], 1
    %s1315 = scalar_lea.sflag [#allocation8], 1
    %1316 = vsyncpa %s1315, 1

// kernel: _lambda_.3
$region0: #{_lambda_.3}
  #allocation0 [shape = 'u32[]', space=smem, size = 0x4, offset = 0x4, fixed_abs, tag = 'smem constant byte address 0x4 - core index']
  #allocation1 [shape = 'u32[144,128]{1,0:T(1,128)}', space=vmem, size = 0x12000, scoped, tag = 'internal scratch']
  #allocation2 [shape = 'f32[4,1]{1,0:T(4,128)}', space=vmem, size = 0x800, scoped, tag = 'scratch operand']
  #allocation3 [shape = 'f32[4,1]{1,0:T(4,128)}', space=vmem, size = 0x800, scoped, tag = 'scratch operand']
  #allocation4 [shape = 'f32[4,1]{1,0:T(4,128)}', space=vmem, size = 0x800, scoped, tag = 'scratch operand']
  %s0 = inlined_call_operand.vmem [shape: f32[4,1], index: 0, kind: input, shape index: {}]
  %s1 = inlined_call_operand.vmem [shape: f32[4,512], index: 1, kind: input, shape index: {}]
  %s2 = inlined_call_operand.vmem [shape: bf16[4,512], index: 2, kind: input, shape index: {}]
  %s3 = inlined_call_operand.hbm [shape: f32[1,1], index: 3, kind: output, shape index: {}]
  %s4 = sld [smem:[#allocation0]]
  $region30: #{_lambda_.3} parent=0
    _
  %s6 = ssub.s32 1, %s4
  %s7 = scalar_select 0, %s6, %s4
  $region1: #{_lambda_.3} parent=0
    #allocation5 [shape = 'u8[512]{0}', space=smem, size = 0x200, scoped, tag = 'output window, operand 0, single buffered']
    #allocation6 [shape = 's32[1]{0}', space=sflag, size = 0x4, scoped, tag = 'scoped memory for _lambda_.3']
    %8 = vsyncpa [#allocation6], 0
    // Predicated region
    $region2: #{_lambda_.3} parent=1 // pred_check
      _
    $region3: #{_lambda_.3} parent=1 // pred_check_branch
      %10 = sbr.rel (0) target = $region5
    $region4: #{_lambda_.3} parent=1 // pred_region
      _
    $region5: #{_lambda_.3} parent=1 // pred_fallthru
      _
    // Predicated region
    $region6: #{_lambda_.3} parent=1 // pred_check
      _
    $region7: #{_lambda_.3} parent=1 // pred_check_branch
      %12 = sbr.rel (0) target = $region9
    $region8: #{_lambda_.3} parent=1 // pred_region
      _
    $region9: #{_lambda_.3} parent=1 // pred_fallthru
      _
    // Predicated region
    $region10: #{_lambda_.3} parent=1 // pred_check
      _
    $region11: #{_lambda_.3} parent=1 // pred_check_branch
      %14 = sbr.rel (0) target = $region13
    $region12: #{_lambda_.3} parent=1 // pred_region
      _
    $region13: #{_lambda_.3} parent=1 // pred_fallthru
      _
    %p15 = scmp.eq.s32.totalorder 0, 0
    // Predicated region
    $region14: #{_lambda_.3} parent=1 // pred_check
      %p16 = pneg %p15
    $region15: #{_lambda_.3} parent=1 // pred_check_branch
      %18 = sbr.rel (%p16) target = $region17
    $region16: #{_lambda_.3} parent=1 // pred_region
      %vm19 = vcmask 3072
      %20 = vst.msk [vmem:[#allocation2] sm:$0xf] %vm19, 0.0
      %21 = vst.msk [vmem:[#allocation3] sm:$0xf] %vm19, 0.0
      %22 = vst.msk [vmem:[#allocation4] sm:$0xf] %vm19, 0.0
    $region17: #{_lambda_.3} parent=1 // pred_fallthru
      _
    %v23 = vld [vmem:[%s0] sm:$0xf]
    %v24 = vlaneseq
    %v25 = vshrl.u32 %v24, 7
    %v26 = vadd.s32 %v25, 8
    %v27 = vadd.s32 %v25, 16
    %v28 = vadd.s32 %v25, 24
    %v29 = vadd.s32 %v25, 32
    %v30 = vadd.s32 %v25, 40
    %v31 = vadd.s32 %v25, 48
    %v32 = vadd.s32 %v25, 56
    %v33 = vadd.s32 %v25, 64
    %v34 = vadd.s32 %v25, 72
    %v35 = vadd.s32 %v25, 80
    %v36 = vadd.s32 %v25, 88
    %v37 = vadd.s32 %v25, 96
    %v38 = vadd.s32 %v25, 104
    %v39 = vadd.s32 %v25, 112
    %v40 = vadd.s32 %v25, 120
    %v41 = vadd.s32 %v25, 128
    %v42 = vadd.s32 %v25, 136
    %v43 = vadd.s32 %v25, 144
    %v44 = vadd.s32 %v25, 152
    %v45 = vadd.s32 %v25, 160
    %v46 = vadd.s32 %v25, 168
    %v47 = vadd.s32 %v25, 176
    %v48 = vadd.s32 %v25, 184
    %v49 = vadd.s32 %v25, 192
    %v50 = vadd.s32 %v25, 200
    %v51 = vadd.s32 %v25, 208
    %v52 = vadd.s32 %v25, 216
    %v53 = vadd.s32 %v25, 224
    %v54 = vadd.s32 %v25, 232
    %v55 = vadd.s32 %v25, 240
    %v56 = vadd.s32 %v25, 248
    %v57 = vlaneseq
    %v58 = vand.u32 %v57, 127
    %v59 = vadd.s32 %v58, 128
    %vm60 = vcmp.le.s32.totalorder %v25, %v58
    %vm61 = vcmp.le.s32.totalorder %v25, %v59
    %vm62 = vcmp.le.s32.totalorder %v26, %v58
    %vm63 = vcmp.le.s32.totalorder %v26, %v59
    %vm64 = vcmp.le.s32.totalorder %v27, %v58
    %vm65 = vcmp.le.s32.totalorder %v27, %v59
    %vm66 = vcmp.le.s32.totalorder %v28, %v58
    %vm67 = vcmp.le.s32.totalorder %v28, %v59
    %vm68 = vcmp.le.s32.totalorder %v29, %v58
    %vm69 = vcmp.le.s32.totalorder %v29, %v59
    %vm70 = vcmp.le.s32.totalorder %v30, %v58
    %vm71 = vcmp.le.s32.totalorder %v30, %v59
    %vm72 = vcmp.le.s32.totalorder %v31, %v58
    %vm73 = vcmp.le.s32.totalorder %v31, %v59
    %vm74 = vcmp.le.s32.totalorder %v32, %v58
    %vm75 = vcmp.le.s32.totalorder %v32, %v59
    %vm76 = vcmp.le.s32.totalorder %v33, %v58
    %vm77 = vcmp.le.s32.totalorder %v33, %v59
    %vm78 = vcmp.le.s32.totalorder %v34, %v58
    %vm79 = vcmp.le.s32.totalorder %v34, %v59
    %vm80 = vcmp.le.s32.totalorder %v35, %v58
    %vm81 = vcmp.le.s32.totalorder %v35, %v59
    %vm82 = vcmp.le.s32.totalorder %v36, %v58
    %vm83 = vcmp.le.s32.totalorder %v36, %v59
    %vm84 = vcmp.le.s32.totalorder %v37, %v58
    %vm85 = vcmp.le.s32.totalorder %v37, %v59
    %vm86 = vcmp.le.s32.totalorder %v38, %v58
    %vm87 = vcmp.le.s32.totalorder %v38, %v59
    %vm88 = vcmp.le.s32.totalorder %v39, %v58
    %vm89 = vcmp.le.s32.totalorder %v39, %v59
    %vm90 = vcmp.le.s32.totalorder %v40, %v58
    %vm91 = vcmp.le.s32.totalorder %v40, %v59
    %vm92 = vcmp.le.s32.totalorder %v41, %v58
    %vm93 = vcmp.le.s32.totalorder %v41, %v59
    %vm94 = vcmp.le.s32.totalorder %v42, %v58
    %vm95 = vcmp.le.s32.totalorder %v42, %v59
    %vm96 = vcmp.le.s32.totalorder %v43, %v58
    %vm97 = vcmp.le.s32.totalorder %v43, %v59
    %vm98 = vcmp.le.s32.totalorder %v44, %v58
    %vm99 = vcmp.le.s32.totalorder %v44, %v59
    %vm100 = vcmp.le.s32.totalorder %v45, %v58
    %vm101 = vcmp.le.s32.totalorder %v45, %v59
    %vm102 = vcmp.le.s32.totalorder %v46, %v58
    %vm103 = vcmp.le.s32.totalorder %v46, %v59
    %vm104 = vcmp.le.s32.totalorder %v47, %v58
    %vm105 = vcmp.le.s32.totalorder %v47, %v59
    %vm106 = vcmp.le.s32.totalorder %v48, %v58
    %vm107 = vcmp.le.s32.totalorder %v48, %v59
    %vm108 = vcmp.le.s32.totalorder %v49, %v58
    %vm109 = vcmp.le.s32.totalorder %v49, %v59
    %vm110 = vcmp.le.s32.totalorder %v50, %v58
    %vm111 = vcmp.le.s32.totalorder %v50, %v59
    %vm112 = vcmp.le.s32.totalorder %v51, %v58
    %vm113 = vcmp.le.s32.totalorder %v51, %v59
    %vm114 = vcmp.le.s32.totalorder %v52, %v58
    %vm115 = vcmp.le.s32.totalorder %v52, %v59
    %vm116 = vcmp.le.s32.totalorder %v53, %v58
    %vm117 = vcmp.le.s32.totalorder %v53, %v59
    %vm118 = vcmp.le.s32.totalorder %v54, %v58
    %vm119 = vcmp.le.s32.totalorder %v54, %v59
    %vm120 = vcmp.le.s32.totalorder %v55, %v58
    %vm121 = vcmp.le.s32.totalorder %v55, %v59
    %vm122 = vcmp.le.s32.totalorder %v56, %v58
    %vm123 = vcmp.le.s32.totalorder %v56, %v59
    %v124 = vsel %vm60, 1, 0
    %v125 = vsel %vm61, 1, 0
    %v126 = vsel %vm62, 1, 0
    %v127 = vsel %vm63, 1, 0
    %v128 = vsel %vm64, 1, 0
    %v129 = vsel %vm65, 1, 0
    %v130 = vsel %vm66, 1, 0
    %v131 = vsel %vm67, 1, 0
    %v132 = vsel %vm68, 1, 0
    %v133 = vsel %vm69, 1, 0
    %v134 = vsel %vm70, 1, 0
    %v135 = vsel %vm71, 1, 0
    %v136 = vsel %vm72, 1, 0
    %v137 = vsel %vm73, 1, 0
    %v138 = vsel %vm74, 1, 0
    %v139 = vsel %vm75, 1, 0
    %v140 = vsel %vm76, 1, 0
    %v141 = vsel %vm77, 1, 0
    %v142 = vsel %vm78, 1, 0
    %v143 = vsel %vm79, 1, 0
    %v144 = vsel %vm80, 1, 0
    %v145 = vsel %vm81, 1, 0
    %v146 = vsel %vm82, 1, 0
    %v147 = vsel %vm83, 1, 0
    %v148 = vsel %vm84, 1, 0
    %v149 = vsel %vm85, 1, 0
    %v150 = vsel %vm86, 1, 0
    %v151 = vsel %vm87, 1, 0
    %v152 = vsel %vm88, 1, 0
    %v153 = vsel %vm89, 1, 0
    %v154 = vsel %vm90, 1, 0
    %v155 = vsel %vm91, 1, 0
    %v156 = vsel %vm92, 1, 0
    %v157 = vsel %vm93, 1, 0
    %v158 = vsel %vm94, 1, 0
    %v159 = vsel %vm95, 1, 0
    %v160 = vsel %vm96, 1, 0
    %v161 = vsel %vm97, 1, 0
    %v162 = vsel %vm98, 1, 0
    %v163 = vsel %vm99, 1, 0
    %v164 = vsel %vm100, 1, 0
    %v165 = vsel %vm101, 1, 0
    %v166 = vsel %vm102, 1, 0
    %v167 = vsel %vm103, 1, 0
    %v168 = vsel %vm104, 1, 0
    %v169 = vsel %vm105, 1, 0
    %v170 = vsel %vm106, 1, 0
    %v171 = vsel %vm107, 1, 0
    %v172 = vsel %vm108, 1, 0
    %v173 = vsel %vm109, 1, 0
    %v174 = vsel %vm110, 1, 0
    %v175 = vsel %vm111, 1, 0
    %v176 = vsel %vm112, 1, 0
    %v177 = vsel %vm113, 1, 0
    %v178 = vsel %vm114, 1, 0
    %v179 = vsel %vm115, 1, 0
    %v180 = vsel %vm116, 1, 0
    %v181 = vsel %vm117, 1, 0
    %v182 = vsel %vm118, 1, 0
    %v183 = vsel %vm119, 1, 0
    %v184 = vsel %vm120, 1, 0
    %v185 = vsel %vm121, 1, 0
    %v186 = vsel %vm122, 1, 0
    %v187 = vsel %vm123, 1, 0
    %v188 = vcvt.s32.f32 %v124
    %v189 = vcvt.s32.f32 %v125
    %v190 = vcvt.s32.f32 %v126
    %v191 = vcvt.s32.f32 %v127
    %v192 = vcvt.s32.f32 %v128
    %v193 = vcvt.s32.f32 %v129
    %v194 = vcvt.s32.f32 %v130
    %v195 = vcvt.s32.f32 %v131
    %v196 = vcvt.s32.f32 %v132
    %v197 = vcvt.s32.f32 %v133
    %v198 = vcvt.s32.f32 %v134
    %v199 = vcvt.s32.f32 %v135
    %v200 = vcvt.s32.f32 %v136
    %v201 = vcvt.s32.f32 %v137
    %v202 = vcvt.s32.f32 %v138
    %v203 = vcvt.s32.f32 %v139
    %v204 = vcvt.s32.f32 %v140
    %v205 = vcvt.s32.f32 %v141
    %v206 = vcvt.s32.f32 %v142
    %v207 = vcvt.s32.f32 %v143
    %v208 = vcvt.s32.f32 %v144
    %v209 = vcvt.s32.f32 %v145
    %v210 = vcvt.s32.f32 %v146
    %v211 = vcvt.s32.f32 %v147
    %v212 = vcvt.s32.f32 %v148
    %v213 = vcvt.s32.f32 %v149
    %v214 = vcvt.s32.f32 %v150
    %v215 = vcvt.s32.f32 %v151
    %v216 = vcvt.s32.f32 %v152
    %v217 = vcvt.s32.f32 %v153
    %v218 = vcvt.s32.f32 %v154
    %v219 = vcvt.s32.f32 %v155
    %v220 = vcvt.s32.f32 %v156
    %v221 = vcvt.s32.f32 %v157
    %v222 = vcvt.s32.f32 %v158
    %v223 = vcvt.s32.f32 %v159
    %v224 = vcvt.s32.f32 %v160
    %v225 = vcvt.s32.f32 %v161
    %v226 = vcvt.s32.f32 %v162
    %v227 = vcvt.s32.f32 %v163
    %v228 = vcvt.s32.f32 %v164
    %v229 = vcvt.s32.f32 %v165
    %v230 = vcvt.s32.f32 %v166
    %v231 = vcvt.s32.f32 %v167
    %v232 = vcvt.s32.f32 %v168
    %v233 = vcvt.s32.f32 %v169
    %v234 = vcvt.s32.f32 %v170
    %v235 = vcvt.s32.f32 %v171
    %v236 = vcvt.s32.f32 %v172
    %v237 = vcvt.s32.f32 %v173
    %v238 = vcvt.s32.f32 %v174
    %v239 = vcvt.s32.f32 %v175
    %v240 = vcvt.s32.f32 %v176
    %v241 = vcvt.s32.f32 %v177
    %v242 = vcvt.s32.f32 %v178
    %v243 = vcvt.s32.f32 %v179
    %v244 = vcvt.s32.f32 %v180
    %v245 = vcvt.s32.f32 %v181
    %v246 = vcvt.s32.f32 %v182
    %v247 = vcvt.s32.f32 %v183
    %v248 = vcvt.s32.f32 %v184
    %v249 = vcvt.s32.f32 %v185
    %v250 = vcvt.s32.f32 %v186
    %v251 = vcvt.s32.f32 %v187
    %v252 = vld [vmem:[#allocation2] sm:$0xf]
    %v253 = vld [vmem:[#allocation3] sm:$0xf]
    %v254 = vld [vmem:[#allocation4] sm:$0xf]
    %v255 = vld [vmem:[%s2] sm:$0xf]
    %v256 = vunpack.c.l.bf16 %v255
    %v257 = vld [vmem:[%s1] sm:$0xff]
    %v258 = vsub.f32 0.0, %v257
    %vm259 = vcmp.ge.f32.partialorder %v256, 2.0
    %v260 = vsel %vm259, 1, 0
    %v261 = vcvt.s32.f32 %v260
    %vm262 = vcmp.eq.f32.partialorder %v256, 1.0
    %v263 = vsel %vm262, 1, 0
    %v264 = vcvt.s32.f32 %v263
    %266 = vset.pattern.permute.xlu0 0
    %267 = vperm.xlu0 %266, %v252
    %v268 = vpop.permute.xlu0 %267
    %v271 = vcombine.high %v261, %v261
    %273 = vmatprep.subr.mxu0 %v189
    %274 = vmatpush1.msra.mxu0 %v188
    %275 = vmatprep.subr.mxu0 %v191
    %276 = vmatpush1.msra.mxu0 %v190
    %277 = vmatprep.subr.mxu0 %v193
    %278 = vmatpush1.msra.mxu0 %v192
    %279 = vmatprep.subr.mxu0 %v195
    %280 = vmatpush1.msra.mxu0 %v194
    %281 = vmatprep.subr.mxu0 %v197
    %282 = vmatpush1.msra.mxu0 %v196
    %283 = vmatprep.subr.mxu0 %v199
    %284 = vmatpush1.msra.mxu0 %v198
    %285 = vmatprep.subr.mxu0 %v201
    %286 = vmatpush1.msra.mxu0 %v200
    %287 = vmatprep.subr.mxu0 %v203
    %288 = vmatpush1.msra.mxu0 %v202
    %289 = vmatprep.subr.mxu0 %v205
    %290 = vmatpush1.msra.mxu0 %v204
    %291 = vmatprep.subr.mxu0 %v207
    %292 = vmatpush1.msra.mxu0 %v206
    %293 = vmatprep.subr.mxu0 %v209
    %294 = vmatpush1.msra.mxu0 %v208
    %295 = vmatprep.subr.mxu0 %v211
    %296 = vmatpush1.msra.mxu0 %v210
    %297 = vmatprep.subr.mxu0 %v213
    %298 = vmatpush1.msra.mxu0 %v212
    %299 = vmatprep.subr.mxu0 %v215
    %300 = vmatpush1.msra.mxu0 %v214
    %301 = vmatprep.subr.mxu0 %v217
    %302 = vmatpush1.msra.mxu0 %v216
    %303 = vmatprep.subr.mxu0 %v219
    %304 = vmatpush1.msra.mxu0 %v218
    %305 = vmatprep.subr.mxu0 %v221
    %306 = vmatpush1.msra.mxu0 %v220
    %307 = vmatprep.subr.mxu0 %v223
    %308 = vmatpush1.msra.mxu0 %v222
    %309 = vmatprep.subr.mxu0 %v225
    %310 = vmatpush1.msra.mxu0 %v224
    %311 = vmatprep.subr.mxu0 %v227
    %312 = vmatpush1.msra.mxu0 %v226
    %313 = vmatprep.subr.mxu0 %v229
    %314 = vmatpush1.msra.mxu0 %v228
    %315 = vmatprep.subr.mxu0 %v231
    %316 = vmatpush1.msra.mxu0 %v230
    %317 = vmatprep.subr.mxu0 %v233
    %318 = vmatpush1.msra.mxu0 %v232
    %319 = vmatprep.subr.mxu0 %v235
    %320 = vmatpush1.msra.mxu0 %v234
    %321 = vmatprep.subr.mxu0 %v237
    %322 = vmatpush1.msra.mxu0 %v236
    %323 = vmatprep.subr.mxu0 %v239
    %324 = vmatpush1.msra.mxu0 %v238
    %325 = vmatprep.subr.mxu0 %v241
    %326 = vmatpush1.msra.mxu0 %v240
    %327 = vmatprep.subr.mxu0 %v243
    %328 = vmatpush1.msra.mxu0 %v242
    %329 = vmatprep.subr.mxu0 %v245
    %330 = vmatpush1.msra.mxu0 %v244
    %331 = vmatprep.subr.mxu0 %v247
    %332 = vmatpush1.msra.mxu0 %v246
    %333 = vmatprep.subr.mxu0 %v249
    %334 = vmatpush1.msra.mxu0 %v248
    %335 = vmatprep.subr.mxu0 %v251
    %336 = vmatpush1.msra.mxu0 %v250
    %337 = vmatprep.mubr.f32.mxu0 %v271
    %338 = vmatmul.mubr.f32.gmra.mrb[0].mxu0 %v261
    %v339 = vpop.f32.mrb[0].mxu0
    %v340 = vadd.f32 %v268, %v339
    %v341 = vpop.f32.mrb[0].mxu0
    %v342 = vadd.f32 %v268, %v341
    %343 = vdwg.mxu0
    %345 = vset.pattern.permute.xlu0 0
    %346 = vperm.xlu0 %345, %v253
    %v347 = vpop.permute.xlu0 %346
    %v350 = vcombine.high %v264, %v264
    %352 = vmatprep.subr.mxu0 %v189
    %353 = vmatpush1.msra.mxu0 %v188
    %354 = vmatprep.subr.mxu0 %v191
    %355 = vmatpush1.msra.mxu0 %v190
    %356 = vmatprep.subr.mxu0 %v193
    %357 = vmatpush1.msra.mxu0 %v192
    %358 = vmatprep.subr.mxu0 %v195
    %359 = vmatpush1.msra.mxu0 %v194
    %360 = vmatprep.subr.mxu0 %v197
    %361 = vmatpush1.msra.mxu0 %v196
    %362 = vmatprep.subr.mxu0 %v199
    %363 = vmatpush1.msra.mxu0 %v198
    %364 = vmatprep.subr.mxu0 %v201
    %365 = vmatpush1.msra.mxu0 %v200
    %366 = vmatprep.subr.mxu0 %v203
    %367 = vmatpush1.msra.mxu0 %v202
    %368 = vmatprep.subr.mxu0 %v205
    %369 = vmatpush1.msra.mxu0 %v204
    %370 = vmatprep.subr.mxu0 %v207
    %371 = vmatpush1.msra.mxu0 %v206
    %372 = vmatprep.subr.mxu0 %v209
    %373 = vmatpush1.msra.mxu0 %v208
    %374 = vmatprep.subr.mxu0 %v211
    %375 = vmatpush1.msra.mxu0 %v210
    %376 = vmatprep.subr.mxu0 %v213
    %377 = vmatpush1.msra.mxu0 %v212
    %378 = vmatprep.subr.mxu0 %v215
    %379 = vmatpush1.msra.mxu0 %v214
    %380 = vmatprep.subr.mxu0 %v217
    %381 = vmatpush1.msra.mxu0 %v216
    %382 = vmatprep.subr.mxu0 %v219
    %383 = vmatpush1.msra.mxu0 %v218
    %384 = vmatprep.subr.mxu0 %v221
    %385 = vmatpush1.msra.mxu0 %v220
    %386 = vmatprep.subr.mxu0 %v223
    %387 = vmatpush1.msra.mxu0 %v222
    %388 = vmatprep.subr.mxu0 %v225
    %389 = vmatpush1.msra.mxu0 %v224
    %390 = vmatprep.subr.mxu0 %v227
    %391 = vmatpush1.msra.mxu0 %v226
    %392 = vmatprep.subr.mxu0 %v229
    %393 = vmatpush1.msra.mxu0 %v228
    %394 = vmatprep.subr.mxu0 %v231
    %395 = vmatpush1.msra.mxu0 %v230
    %396 = vmatprep.subr.mxu0 %v233
    %397 = vmatpush1.msra.mxu0 %v232
    %398 = vmatprep.subr.mxu0 %v235
    %399 = vmatpush1.msra.mxu0 %v234
    %400 = vmatprep.subr.mxu0 %v237
    %401 = vmatpush1.msra.mxu0 %v236
    %402 = vmatprep.subr.mxu0 %v239
    %403 = vmatpush1.msra.mxu0 %v238
    %404 = vmatprep.subr.mxu0 %v241
    %405 = vmatpush1.msra.mxu0 %v240
    %406 = vmatprep.subr.mxu0 %v243
    %407 = vmatpush1.msra.mxu0 %v242
    %408 = vmatprep.subr.mxu0 %v245
    %409 = vmatpush1.msra.mxu0 %v244
    %410 = vmatprep.subr.mxu0 %v247
    %411 = vmatpush1.msra.mxu0 %v246
    %412 = vmatprep.subr.mxu0 %v249
    %413 = vmatpush1.msra.mxu0 %v248
    %414 = vmatprep.subr.mxu0 %v251
    %415 = vmatpush1.msra.mxu0 %v250
    %416 = vmatprep.mubr.f32.mxu0 %v350
    %417 = vmatmul.mubr.f32.gmra.mrb[0].mxu0 %v264
    %v418 = vpop.f32.mrb[0].mxu0
    %v419 = vadd.f32 %v347, %v418
    %v420 = vpop.f32.mrb[0].mxu0
    %v421 = vadd.f32 %v347, %v420
    %422 = vdwg.mxu0
    %424 = vset.pattern.permute.xlu0 0
    %425 = vperm.xlu0 %424, %v23
    %v426 = vpop.permute.xlu0 %425
    %v428 = vsub.f32 %v426, %v340
    %v429 = vsub.f32 %v426, %v342
    %v430 = vadd.f32 %v426, %v419
    %v431 = vadd.f32 %v426, %v421
    %v432 = vmax.f32 %v430, 1.0
    %v433 = vmax.f32 %v431, 1.0
    %v434 = vrcp.pop %v432
    %v435 = vmul.f32 %v428, %v434
    %v436 = vrcp.pop %v433
    %v437 = vmul.f32 %v429, %v436
    %v438 = vsub.f32 1.0, %v435
    %v439 = vsub.f32 1.0, %v437
    %v440 = vsub.f32 %v340, %v261
    %v441 = vsub.f32 %v342, %v271
    %v442 = vsub.f32 %v426, %v440
    %v443 = vsub.f32 %v426, %v441
    %v444 = vsub.f32 %v419, %v264
    %v445 = vsub.f32 %v421, %v350
    %v446 = vadd.f32 %v426, %v444
    %v447 = vadd.f32 %v426, %v445
    %v448 = vmax.f32 %v446, 1.0
    %v449 = vmax.f32 %v447, 1.0
    %v450 = vrcp.pop %v448
    %v451 = vmul.f32 %v442, %v450
    %v452 = vrcp.pop %v449
    %v453 = vmul.f32 %v443, %v452
    %v454 = vsub.f32 1.0, %v451
    %v455 = vsub.f32 1.0, %v453
    %v456 = vsub.f32 %v438, %v454
    %v457 = vsub.f32 %v439, %v455
    %v460 = vcombine.low %v456, %v457
    %v462 = vmul.f32 %v258, %v460
    %v464 = vcombine.high %v462, %v462
    %vm466 = vcmask 1043456
    %v467 = vsel %vm466, %v462, 0.0
    %v468 = vsel %vm466, %v464, 0.0
    %v469 = vadd.f32 %v467, %v468
    %470 = vadd.xlane.f32.xlu0 %v469
    %v471 = vpop.xlane.xlu0 %470
    %v472 = vadd.f32 %v254, %v471
    %v473 = vsel %vm466, %v261, 0.0
    %v474 = vsel %vm466, %v271, 0.0
    %v475 = vadd.f32 %v473, %v474
    %476 = vadd.xlane.f32.xlu0 %v475
    %v477 = vpop.xlane.xlu0 %476
    %v478 = vadd.f32 %v252, %v477
    %v479 = vsel %vm466, %v264, 0.0
    %v480 = vsel %vm466, %v350, 0.0
    %v481 = vadd.f32 %v479, %v480
    %482 = vadd.xlane.f32.xlu0 %v481
    %v483 = vpop.xlane.xlu0 %482
    %v484 = vadd.f32 %v253, %v483
    %v485 = vld [vmem:[%s2 + $0x4] sm:$0xf]
    %v486 = vunpack.c.l.bf16 %v485
    %v487 = vld [vmem:[%s1 + $0x8] sm:$0xff]
    %v488 = vsub.f32 0.0, %v487
    %vm489 = vcmp.ge.f32.partialorder %v486, 2.0
    %v490 = vsel %vm489, 1, 0
    %v491 = vcvt.s32.f32 %v490
    %vm492 = vcmp.eq.f32.partialorder %v486, 1.0
    %v493 = vsel %vm492, 1, 0
    %v494 = vcvt.s32.f32 %v493
    %496 = vset.pattern.permute.xlu0 0
    %497 = vperm.xlu0 %496, %v478
    %v498 = vpop.permute.xlu0 %497
    %v501 = vcombine.high %v491, %v491
    %503 = vmatprep.subr.mxu0 %v189
    %504 = vmatpush1.msra.mxu0 %v188
    %505 = vmatprep.subr.mxu0 %v191
    %506 = vmatpush1.msra.mxu0 %v190
    %507 = vmatprep.subr.mxu0 %v193
    %508 = vmatpush1.msra.mxu0 %v192
    %509 = vmatprep.subr.mxu0 %v195
    %510 = vmatpush1.msra.mxu0 %v194
    %511 = vmatprep.subr.mxu0 %v197
    %512 = vmatpush1.msra.mxu0 %v196
    %513 = vmatprep.subr.mxu0 %v199
    %514 = vmatpush1.msra.mxu0 %v198
    %515 = vmatprep.subr.mxu0 %v201
    %516 = vmatpush1.msra.mxu0 %v200
    %517 = vmatprep.subr.mxu0 %v203
    %518 = vmatpush1.msra.mxu0 %v202
    %519 = vmatprep.subr.mxu0 %v205
    %520 = vmatpush1.msra.mxu0 %v204
    %521 = vmatprep.subr.mxu0 %v207
    %522 = vmatpush1.msra.mxu0 %v206
    %523 = vmatprep.subr.mxu0 %v209
    %524 = vmatpush1.msra.mxu0 %v208
    %525 = vmatprep.subr.mxu0 %v211
    %526 = vmatpush1.msra.mxu0 %v210
    %527 = vmatprep.subr.mxu0 %v213
    %528 = vmatpush1.msra.mxu0 %v212
    %529 = vmatprep.subr.mxu0 %v215
    %530 = vmatpush1.msra.mxu0 %v214
    %531 = vmatprep.subr.mxu0 %v217
    %532 = vmatpush1.msra.mxu0 %v216
    %533 = vmatprep.subr.mxu0 %v219
    %534 = vmatpush1.msra.mxu0 %v218
    %535 = vmatprep.subr.mxu0 %v221
    %536 = vmatpush1.msra.mxu0 %v220
    %537 = vmatprep.subr.mxu0 %v223
    %538 = vmatpush1.msra.mxu0 %v222
    %539 = vmatprep.subr.mxu0 %v225
    %540 = vmatpush1.msra.mxu0 %v224
    %541 = vmatprep.subr.mxu0 %v227
    %542 = vmatpush1.msra.mxu0 %v226
    %543 = vmatprep.subr.mxu0 %v229
    %544 = vmatpush1.msra.mxu0 %v228
    %545 = vmatprep.subr.mxu0 %v231
    %546 = vmatpush1.msra.mxu0 %v230
    %547 = vmatprep.subr.mxu0 %v233
    %548 = vmatpush1.msra.mxu0 %v232
    %549 = vmatprep.subr.mxu0 %v235
    %550 = vmatpush1.msra.mxu0 %v234
    %551 = vmatprep.subr.mxu0 %v237
    %552 = vmatpush1.msra.mxu0 %v236
    %553 = vmatprep.subr.mxu0 %v239
    %554 = vmatpush1.msra.mxu0 %v238
    %555 = vmatprep.subr.mxu0 %v241
    %556 = vmatpush1.msra.mxu0 %v240
    %557 = vmatprep.subr.mxu0 %v243
    %558 = vmatpush1.msra.mxu0 %v242
    %559 = vmatprep.subr.mxu0 %v245
    %560 = vmatpush1.msra.mxu0 %v244
    %561 = vmatprep.subr.mxu0 %v247
    %562 = vmatpush1.msra.mxu0 %v246
    %563 = vmatprep.subr.mxu0 %v249
    %564 = vmatpush1.msra.mxu0 %v248
    %565 = vmatprep.subr.mxu0 %v251
    %566 = vmatpush1.msra.mxu0 %v250
    %567 = vmatprep.mubr.f32.mxu0 %v501
    %568 = vmatmul.mubr.f32.gmra.mrb[0].mxu0 %v491
    %v569 = vpop.f32.mrb[0].mxu0
    %v570 = vadd.f32 %v498, %v569
    %v571 = vpop.f32.mrb[0].mxu0
    %v572 = vadd.f32 %v498, %v571
    %573 = vdwg.mxu0
    %575 = vset.pattern.permute.xlu0 0
    %576 = vperm.xlu0 %575, %v484
    %v577 = vpop.permute.xlu0 %576
    %v580 = vcombine.high %v494, %v494
    %582 = vmatprep.subr.mxu0 %v189
    %583 = vmatpush1.msra.mxu0 %v188
    %584 = vmatprep.subr.mxu0 %v191
    %585 = vmatpush1.msra.mxu0 %v190
    %586 = vmatprep.subr.mxu0 %v193
    %587 = vmatpush1.msra.mxu0 %v192
    %588 = vmatprep.subr.mxu0 %v195
    %589 = vmatpush1.msra.mxu0 %v194
    %590 = vmatprep.subr.mxu0 %v197
    %591 = vmatpush1.msra.mxu0 %v196
    %592 = vmatprep.subr.mxu0 %v199
    %593 = vmatpush1.msra.mxu0 %v198
    %594 = vmatprep.subr.mxu0 %v201
    %595 = vmatpush1.msra.mxu0 %v200
    %596 = vmatprep.subr.mxu0 %v203
    %597 = vmatpush1.msra.mxu0 %v202
    %598 = vmatprep.subr.mxu0 %v205
    %599 = vmatpush1.msra.mxu0 %v204
    %600 = vmatprep.subr.mxu0 %v207
    %601 = vmatpush1.msra.mxu0 %v206
    %602 = vmatprep.subr.mxu0 %v209
    %603 = vmatpush1.msra.mxu0 %v208
    %604 = vmatprep.subr.mxu0 %v211
    %605 = vmatpush1.msra.mxu0 %v210
    %606 = vmatprep.subr.mxu0 %v213
    %607 = vmatpush1.msra.mxu0 %v212
    %608 = vmatprep.subr.mxu0 %v215
    %609 = vmatpush1.msra.mxu0 %v214
    %610 = vmatprep.subr.mxu0 %v217
    %611 = vmatpush1.msra.mxu0 %v216
    %612 = vmatprep.subr.mxu0 %v219
    %613 = vmatpush1.msra.mxu0 %v218
    %614 = vmatprep.subr.mxu0 %v221
    %615 = vmatpush1.msra.mxu0 %v220
    %616 = vmatprep.subr.mxu0 %v223
    %617 = vmatpush1.msra.mxu0 %v222
    %618 = vmatprep.subr.mxu0 %v225
    %619 = vmatpush1.msra.mxu0 %v224
    %620 = vmatprep.subr.mxu0 %v227
    %621 = vmatpush1.msra.mxu0 %v226
    %622 = vmatprep.subr.mxu0 %v229
    %623 = vmatpush1.msra.mxu0 %v228
    %624 = vmatprep.subr.mxu0 %v231
    %625 = vmatpush1.msra.mxu0 %v230
    %626 = vmatprep.subr.mxu0 %v233
    %627 = vmatpush1.msra.mxu0 %v232
    %628 = vmatprep.subr.mxu0 %v235
    %629 = vmatpush1.msra.mxu0 %v234
    %630 = vmatprep.subr.mxu0 %v237
    %631 = vmatpush1.msra.mxu0 %v236
    %632 = vmatprep.subr.mxu0 %v239
    %633 = vmatpush1.msra.mxu0 %v238
    %634 = vmatprep.subr.mxu0 %v241
    %635 = vmatpush1.msra.mxu0 %v240
    %636 = vmatprep.subr.mxu0 %v243
    %637 = vmatpush1.msra.mxu0 %v242
    %638 = vmatprep.subr.mxu0 %v245
    %639 = vmatpush1.msra.mxu0 %v244
    %640 = vmatprep.subr.mxu0 %v247
    %641 = vmatpush1.msra.mxu0 %v246
    %642 = vmatprep.subr.mxu0 %v249
    %643 = vmatpush1.msra.mxu0 %v248
    %644 = vmatprep.subr.mxu0 %v251
    %645 = vmatpush1.msra.mxu0 %v250
    %646 = vmatprep.mubr.f32.mxu0 %v580
    %647 = vmatmul.mubr.f32.gmra.mrb[0].mxu0 %v494
    %v648 = vpop.f32.mrb[0].mxu0
    %v649 = vadd.f32 %v577, %v648
    %v650 = vpop.f32.mrb[0].mxu0
    %v651 = vadd.f32 %v577, %v650
    %652 = vdwg.mxu0
    %v653 = vsub.f32 %v426, %v570
    %v654 = vsub.f32 %v426, %v572
    %v655 = vadd.f32 %v426, %v649
    %v656 = vadd.f32 %v426, %v651
    %v657 = vmax.f32 %v655, 1.0
    %v658 = vmax.f32 %v656, 1.0
    %v659 = vrcp.pop %v657
    %v660 = vmul.f32 %v653, %v659
    %v661 = vrcp.pop %v658
    %v662 = vmul.f32 %v654, %v661
    %v663 = vsub.f32 1.0, %v660
    %v664 = vsub.f32 1.0, %v662
    %v665 = vsub.f32 %v570, %v491
    %v666 = vsub.f32 %v572, %v501
    %v667 = vsub.f32 %v426, %v665
    %v668 = vsub.f32 %v426, %v666
    %v669 = vsub.f32 %v649, %v494
    %v670 = vsub.f32 %v651, %v580
    %v671 = vadd.f32 %v426, %v669
    %v672 = vadd.f32 %v426, %v670
    %v673 = vmax.f32 %v671, 1.0
    %v674 = vmax.f32 %v672, 1.0
    %v675 = vrcp.pop %v673
    %v676 = vmul.f32 %v667, %v675
    %v677 = vrcp.pop %v674
    %v678 = vmul.f32 %v668, %v677
    %v679 = vsub.f32 1.0, %v676
    %v680 = vsub.f32 1.0, %v678
    %v681 = vsub.f32 %v663, %v679
    %v682 = vsub.f32 %v664, %v680
    %v685 = vcombine.low %v681, %v682
    %v687 = vmul.f32 %v488, %v685
    %v689 = vcombine.high %v687, %v687
    %v691 = vsel %vm466, %v687, 0.0
    %v692 = vsel %vm466, %v689, 0.0
    %v693 = vadd.f32 %v691, %v692
    %694 = vadd.xlane.f32.xlu0 %v693
    %v695 = vpop.xlane.xlu0 %694
    %v696 = vadd.f32 %v472, %v695
    %v697 = vsel %vm466, %v491, 0.0
    %v698 = vsel %vm466, %v501, 0.0
    %v699 = vadd.f32 %v697, %v698
    %700 = vadd.xlane.f32.xlu0 %v699
    %v701 = vpop.xlane.xlu0 %700
    %v702 = vadd.f32 %v478, %v701
    %v703 = vsel %vm466, %v494, 0.0
    %v704 = vsel %vm466, %v580, 0.0
    %v705 = vadd.f32 %v703, %v704
    %706 = vadd.xlane.f32.xlu0 %v705
    %v707 = vpop.xlane.xlu0 %706
    %v708 = vadd.f32 %v484, %v707
    %vm709 = vcmask 3072
    %710 = vst.msk [vmem:[#allocation2] sm:$0xf] %vm709, %v702
    %711 = vst.msk [vmem:[#allocation3] sm:$0xf] %vm709, %v708
    %712 = vst.msk [vmem:[#allocation4] sm:$0xf] %vm709, %v696
    // Predicated region
    $region18: #{_lambda_.3} parent=1 // pred_check
      %p713 = pneg %p15
    $region19: #{_lambda_.3} parent=1 // pred_check_branch
      %715 = sbr.rel (%p713) target = $region21
    $region20: #{_lambda_.3} parent=1 // pred_region
      %vm716 = vcmp.gt.f32.partialorder %v23, 0.0
      %v717 = vsel %vm716, 1, 0
      %v718 = vcvt.s32.f32 %v717
      %v719 = vmul.f32 %v696, %v718
      %v720 = vsel %vm709, %v719, 0.0
      %721 = vadd.xlane.f32.xlu0 %v720
      %v722 = vpop.xlane.xlu0 %721
      %v723 = vrot.slane %v722, 4
      %v724 = vadd.f32 %v722, %v723
      %v725 = vrot.slane %v724, 2
      %v726 = vadd.f32 %v724, %v725
      %v727 = vrot.slane %v726, 1
      %v728 = vadd.f32 %v726, %v727
      %s729 = vtos %v728
      %v730 = vsel %vm709, %v718, 0.0
      %731 = vadd.xlane.f32.xlu0 %v730
      %v732 = vpop.xlane.xlu0 %731
      %v733 = vrot.slane %v732, 4
      %v734 = vadd.f32 %v732, %v733
      %v735 = vrot.slane %v734, 2
      %v736 = vadd.f32 %v734, %v735
      %v737 = vrot.slane %v736, 1
      %v738 = vadd.f32 %v736, %v737
      %s739 = vtos %v738
      %s740 = smax.f32 %s739, 1.0
      %v741 = vstv %s740
      %v742 = vrcp.pop %v741
      %s743 = vtos %v742
      %s744 = smul.f32 %s729, %s743
      %s745 = scalar_lea.smem [#allocation5], 0
      %746 = sst [smem:[%s745]] %s744
    $region21: #{_lambda_.3} parent=1 // pred_fallthru
      _
    // Predicated region
    $region22: #{_lambda_.3} parent=1 // pred_check
      _
    $region23: #{_lambda_.3} parent=1 // pred_check_branch
      %748 = sbr.rel (0) target = $region25
    $region24: #{_lambda_.3} parent=1 // pred_region
      %s750 = ssub.s32 16, 16
      %751 = vsyncadd [#allocation6], %s750
      %754 = dma.smem_to_hbm [#allocation5], 16, %s3, [#allocation6]
    $region25: #{_lambda_.3} parent=1 // pred_fallthru
      _
    // Predicated region
    $region26: #{_lambda_.3} parent=1 // pred_check
      _
    $region27: #{_lambda_.3} parent=1 // pred_check_branch
      %756 = sbr.rel (0) target = $region29
    $region28: #{_lambda_.3} parent=1 // pred_region
      %757 = dma.done [#allocation6], 16
    $region29: #{_lambda_.3} parent=1 // pred_fallthru
      _
    %758 = sfence
    %759 = vsyncpa [#allocation6], 1

</llo_original>
